<compile_context>
chip_gen: v6e
topology: v6e:2x2x1
jax: 0.10.0
libtpu: 0.0.40
codegen_flags: <defaults>
</compile_context>

<pallas_src>
import math

import jax
import jax.numpy as jnp
from jax.experimental import pallas as pl
from jax.experimental.pallas import tpu as pltpu


def _phys_vmem_bytes(default: int = 64 * 2 ** 20) -> int:
    try:
        return int(pltpu.get_tpu_info().vmem_capacity_bytes)
    except Exception:
        return default


def _pick_tile(L: int, target: int) -> int:
    """Largest divisor of L that is <= target and a multiple of 8 (else L itself)."""
    if L <= target:
        return L
    for t in range(target, 7, -1):
        if L % t == 0 and t % 8 == 0:
            return t
    # TODO(synk): no multiple-of-8 divisor <= target (e.g. L=257 with a class token);
    # falls back to the full sequence -- pad L or add masked tiles for such shapes.
    return L


def _default_tiles(L: int):
    """(q_tile, kv_tile) targets, scaled down on 64-MiB-VMEM parts (v7x)."""
    if _phys_vmem_bytes() <= 64 * 2 ** 20:
        return _pick_tile(L, 128), _pick_tile(L, 512)
    return _pick_tile(L, 256), _pick_tile(L, 1024)


# ----------------------------------------------------------------------------
# Kernel: one ResidualAttentionBlock, one batch element x one query-row tile.
# ----------------------------------------------------------------------------
def make_block_kernel(H: int, D: int, L: int, tlq: int, tkv: int):
    hd = D // H
    scale = 1.0 / math.sqrt(hd)
    eps = 1e-5
    n_q = L // tlq
    n_kv = L // tkv

    def kernel(x_ref,
               ln1w, ln1b, wq, bq, wk, bk, wv, bv, wo, bo,
               ln2w, ln2b, wfc, bfc, wproj, bproj,
               o_ref,
               *scratch):
        if n_kv > 1:
            q_s, k_s, v_s, m_s, l_s, acc_s = scratch
        else:
            q_s, k_s, v_s = scratch

        def layer_norm(t, w_ref, b_ref):                         # fp32 (VPU/EUP)
            mu = jnp.mean(t, axis=-1, keepdims=True)
            var = jnp.mean(jnp.square(t - mu), axis=-1, keepdims=True)
            return (t - mu) * jax.lax.rsqrt(var + eps) * w_ref[0] + b_ref[0]

        def compute_kv(xn_bf):
            # Full-width K/V projections: bf16 operands, fp32 MXU accumulation.
            kproj = jnp.dot(xn_bf, wk[...], preferred_element_type=jnp.float32) + bk[0]
            vproj = jnp.dot(xn_bf, wv[...], preferred_element_type=jnp.float32) + bv[0]
            k_bf = kproj.astype(jnp.bfloat16)
            v_bf = vproj.astype(jnp.bfloat16)
            for h in range(H):                                   # head-major scratch
                k_s[h] = k_bf[:, h * hd:(h + 1) * hd]
                v_s[h] = v_bf[:, h * hd:(h + 1) * hd]

        # ---------- LN1 + K/V: once per batch element (hoisted out of q-tiles) ----------
        if n_q == 1:
            x_q = x_ref[0]                                        # (L, D) fp32
            xn_q = layer_norm(x_q, ln1w, ln1b)
            compute_kv(xn_q.astype(jnp.bfloat16))
        else:
            @pl.when(pl.program_id(1) == 0)
            def _():
                xn_kv = layer_norm(x_ref[0], ln1w, ln1b)
                compute_kv(xn_kv.astype(jnp.bfloat16))

            q_start = pl.multiple_of(pl.program_id(1) * tlq, tlq)
            x_q = x_ref[0, pl.ds(q_start, tlq), :]                # (tlq, D) fp32
            xn_q = layer_norm(x_q, ln1w, ln1b)

        # ---------- Q projection for this tile (softmax scale folded into q) ----------
        q = jnp.dot(xn_q.astype(jnp.bfloat16), wq[...],
                    preferred_element_type=jnp.float32) + bq[0]
        q_bf = (q * scale).astype(jnp.bfloat16)
        for h in range(H):
            q_s[h] = q_bf[:, h * hd:(h + 1) * hd]
        qh = q_s[...]                                             # (H, tlq, hd) bf16

        # ---------- attention: softmax over KV, tiled (online) when n_kv > 1 ----------
        if n_kv == 1:
            kh = k_s[...]                                         # (H, L, hd) bf16
            vh = v_s[...]
            s = jnp.einsum("hqd,hkd->hqk", qh, kh,
                           preferred_element_type=jnp.float32)    # (H, tlq, L) fp32
            m = jnp.max(s, axis=-1, keepdims=True)
            e = jnp.exp(s - m)
            p = e * pl.reciprocal(jnp.sum(e, axis=-1, keepdims=True), approx=True)
            oh = jnp.einsum("hqk,hkd->hqd", p.astype(jnp.bfloat16), vh,
                            preferred_element_type=jnp.float32)   # (H, tlq, hd) fp32
        else:
            m_s[...] = jnp.full(m_s.shape, -jnp.inf, dtype=jnp.float32)
            l_s[...] = jnp.zeros(l_s.shape, dtype=jnp.float32)
            acc_s[...] = jnp.zeros(acc_s.shape, dtype=jnp.float32)

            @pl.loop(0, n_kv)
            def _(kv):
                start = pl.multiple_of(kv * tkv, tkv)
                kb = k_s[:, pl.ds(start, tkv), :]                 # (H, tkv, hd) bf16
                vb = v_s[:, pl.ds(start, tkv), :]
                s = jnp.einsum("hqd,hkd->hqk", qh, kb,
                               preferred_element_type=jnp.float32)  # (H, tlq, tkv)
                m_prev = m_s[...]
                m_new = jnp.maximum(m_prev, jnp.max(s, axis=-1))
                alpha = jnp.exp(m_prev - m_new)
                p = jnp.exp(s - m_new[:, :, None])
                l_s[...] = alpha * l_s[...] + jnp.sum(p, axis=-1)
                acc_s[...] = alpha[:, :, None] * acc_s[...] + jnp.einsum(
                    "hqk,hkd->hqd", p.astype(jnp.bfloat16), vb,
                    preferred_element_type=jnp.float32)
                m_s[...] = m_new

            inv = pl.reciprocal(l_s[...], approx=True)            # (H, tlq)
            oh = acc_s[...] * inv[:, :, None]                     # (H, tlq, hd) fp32

        # ---------- head merge folded into the out-projection (no concat) ----------
        oh_bf = oh.astype(jnp.bfloat16)
        attn = bo[0]
        for h in range(H):
            attn = attn + jnp.dot(oh_bf[h], wo[pl.ds(h * hd, hd), :],
                                  preferred_element_type=jnp.float32)
        x1 = x_q + attn                                           # residual, fp32

        # ---------- MLP branch (pre-LN) ----------
        xn2 = layer_norm(x1, ln2w, ln2b).astype(jnp.bfloat16)
        hcc = jnp.dot(xn2, wfc[...], preferred_element_type=jnp.float32) + bfc[0]
        hcc = hcc * jax.nn.sigmoid(1.702 * hcc)                   # QuickGELU in fp32
        y = jnp.dot(hcc.astype(jnp.bfloat16), wproj[...],
                    preferred_element_type=jnp.float32) + bproj[0]

        o_ref[0] = x1 + y

    return kernel


# ----------------------------------------------------------------------------
# Per-layer wrapper.
# ----------------------------------------------------------------------------
def residual_attention_block(x_nld, weights, heads, q_tile=None, kv_tile=None):
    """x_nld: (batch, seq, width) fp32. weights: tuple from prepare_layer_params."""
    N, L, D = x_nld.shape
    assert D % heads == 0
    hd = D // heads
    tlq_d, tkv_d = _default_tiles(L)
    tlq = q_tile if q_tile is not None else tlq_d
    tkv = kv_tile if kv_tile is not None else tkv_d
    assert L % tlq == 0 and L % tkv == 0
    n_q = L // tlq
    n_kv = L // tkv
    kernel = make_block_kernel(heads, D, L, tlq, tkv)

    # x: per-batch block, re-used across q-tiles (index only depends on b).
    in_specs = [pl.BlockSpec((1, L, D), lambda b, qi: (b, 0, 0))]
    # Weights never change across the grid -> constant index map, single buffer.
    in_specs += [pl.BlockSpec(w.shape, lambda b, qi: (0, 0),
                              pipeline_mode=pl.Buffered(1)) for w in weights]
    out_spec = pl.BlockSpec((1, tlq, D), lambda b, qi: (b, qi, 0))

    scratch_shapes = [
        pltpu.VMEM((heads, tlq, hd), jnp.bfloat16),   # q, head-major (per tile)
        pltpu.VMEM((heads, L, hd), jnp.bfloat16),     # k, head-major (per batch elt)
        pltpu.VMEM((heads, L, hd), jnp.bfloat16),     # v, head-major (per batch elt)
    ]
    if n_kv > 1:
        scratch_shapes += [
            pltpu.VMEM((heads, tlq), jnp.float32),        # running max
            pltpu.VMEM((heads, tlq), jnp.float32),        # running denominator
            pltpu.VMEM((heads, tlq, hd), jnp.float32),    # output accumulator
        ]

    # ---- VMEM budget ----
    wbytes = sum(int(w.size) * jnp.dtype(w.dtype).itemsize for w in weights)  # Buffered(1)
    io_bytes = 2 * (L * D * 4) + 2 * (tlq * D * 4)     # double-buffered x block + out tile
    scr_bytes = 2 * heads * L * hd * 2 + heads * tlq * hd * 2
    if n_kv > 1:
        scr_bytes += 2 * heads * tlq * 4 + heads * tlq * hd * 4
    kv_blk = tkv if n_kv > 1 else L
    act_bytes = 4 * (2 * L * D                       # LN1 / K,V fp32 temps (init step)
                     + 6 * tlq * D                   # q, attn, x1, y, LN temporaries
                     + 3 * heads * tlq * kv_blk      # s, p (fp32) + p (bf16) per kv block
                     + heads * tlq * hd              # oh
                     + 3 * tlq * 4 * D)              # MLP hidden fp32 + bf16 copy
    est = wbytes + io_bytes + scr_bytes + act_bytes
    vmem_limit = int(min(max(int(1.5 * est), 48 * 2 ** 20),
                         int(0.9 * _phys_vmem_bytes())))

    return pl.pallas_call(
        kernel,
        out_shape=jax.ShapeDtypeStruct((N, L, D), jnp.float32),
        grid_spec=pltpu.PrefetchScalarGridSpec(
            num_scalar_prefetch=0,
            grid=(N, n_q),
            in_specs=in_specs,
            out_specs=out_spec,
            scratch_shapes=scratch_shapes,
        ),
        # x is consumed and fully overwritten -> reuse its HBM buffer (only safe when
        # the whole sequence is a single q-tile).
        input_output_aliases=({0: 0} if n_q == 1 else {}),
        compiler_params=pltpu.CompilerParams(
            # q-tile axis must be "arbitrary": tiles qi > 0 depend on the K/V scratch
            # initialized at qi == 0 on the same core.
            dimension_semantics=("parallel", "arbitrary"),
            vmem_limit_bytes=vmem_limit,
        ),
    )(x_nld, *weights)


def prepare_layer_params(p):
    """One-time (outside the forward / jit) transpose + split + bf16 cast."""
    D = p["ln1_w"].shape[0]
    wq, wk, wv = jnp.split(p["w_qkv"], 3, axis=0)
    bq, bk, bv = jnp.split(p["b_qkv"], 3)
    bf16, f32 = jnp.bfloat16, jnp.float32
    return (
        p["ln1_w"].reshape(1, D).astype(f32), p["ln1_b"].reshape(1, D).astype(f32),
        wq.T.astype(bf16), bq.reshape(1, D).astype(f32),
        wk.T.astype(bf16), bk.reshape(1, D).astype(f32),
        wv.T.astype(bf16), bv.reshape(1, D).astype(f32),
        p["w_o"].T.astype(bf16), p["b_o"].reshape(1, D).astype(f32),
        p["ln2_w"].reshape(1, D).astype(f32), p["ln2_b"].reshape(1, D).astype(f32),
        p["w_fc"].T.astype(bf16), p["b_fc"].reshape(1, 4 * D).astype(f32),
        p["w_proj"].T.astype(bf16), p["b_proj"].reshape(1, D).astype(f32),
    )


def transformer_forward(x_lnd, layer_weights, heads, q_tile=None, kv_tile=None):
    """x_lnd: (seq, batch, width) fp32 — same layout as the PyTorch module."""
    x_nld = jnp.transpose(x_lnd, (1, 0, 2))          # (batch, seq, width)
    for w in layer_weights:
        x_nld = residual_attention_block(x_nld, w, heads,
                                         q_tile=q_tile, kv_tile=kv_tile)
    return jnp.transpose(x_nld, (1, 0, 2))


# ----------------------------------------------------------------------------
# Pure-JAX fp32 reference (mirrors PyTorch: nn.MultiheadAttention with q=k=v,
# no mask; QuickGELU MLP; pre-LN residuals).
# ----------------------------------------------------------------------------
def ref_block(x_lnd, p, heads):
    L, N, D = x_lnd.shape
    hd = D // heads

    def ln(v, w, b):
        mu = v.mean(-1, keepdims=True)
        var = ((v - mu) ** 2).mean(-1, keepdims=True)
        return (v - mu) / jnp.sqrt(var + 1e-5) * w + b

    xn = ln(x_lnd, p["ln1_w"], p["ln1_b"])
    qkv = xn @ p["w_qkv"].T + p["b_qkv"]
    q, k, v = jnp.split(qkv, 3, axis=-1)

    def shape_heads(t):
        return t.reshape(L, N, heads, hd).transpose(1, 2, 0, 3)   # (N, H, L, hd)

    qh, kh, vh = shape_heads(q), shape_heads(k), shape_heads(v)
    s = jnp.einsum("nhqd,nhkd->nhqk", qh, kh) / math.sqrt(hd)
    a = jax.nn.softmax(s, axis=-1)
    o = jnp.einsum("nhqk,nhkd->nhqd", a, vh)
    o = o.transpose(2, 0, 1, 3).reshape(L, N, D)
    x = x_lnd + (o @ p["w_o"].T + p["b_o"])

    xn2 = ln(x, p["ln2_w"], p["ln2_b"])
    h = xn2 @ p["w_fc"].T + p["b_fc"]
    h = h * jax.nn.sigmoid(1.702 * h)
    return x + (h @ p["w_proj"].T + p["b_proj"])


def ref_transformer(x_lnd, layer_params, heads):
    for p in layer_params:
        x_lnd = ref_block(x_lnd, p, heads)
    return x_lnd


# ----------------------------------------------------------------------------
def init_layer_params(key, width):
    ks = jax.random.split(key, 6)
    s = 0.02
    return {
        "ln1_w": jnp.ones((width,), jnp.float32),
        "ln1_b": jnp.zeros((width,), jnp.float32),
        "w_qkv": s * jax.random.normal(ks[0], (3 * width, width), jnp.float32),
        "b_qkv": s * jax.random.normal(ks[1], (3 * width,), jnp.float32),
        "w_o": s * jax.random.normal(ks[2], (width, width), jnp.float32),
        "b_o": jnp.zeros((width,), jnp.float32),
        "ln2_w": jnp.ones((width,), jnp.float32),
        "ln2_b": jnp.zeros((width,), jnp.float32),
        "w_fc": s * jax.random.normal(ks[3], (4 * width, width), jnp.float32),
        "b_fc": s * jax.random.normal(ks[4], (4 * width,), jnp.float32),
        "w_proj": s * jax.random.normal(ks[5], (width, 4 * width), jnp.float32),
        "b_proj": jnp.zeros((width,), jnp.float32),
    }


if __name__ == "__main__":
    # NOTE: toy shapes (D=32, L<=32) are for correctness only; for real performance
    # use width a multiple of 128 and a multiple-of-8 seq so stores are lane-dense.
    def run_case(seq, batch, width, heads, layers, q_tile=None, kv_tile=None):
        key = jax.random.PRNGKey(0)
        kx, *kls = jax.random.split(key, layers + 1)
        x = jax.random.normal(kx, (seq, batch, width), jnp.float32)   # (L, N, D)
        params = [init_layer_params(k, width) for k in kls]
        prepared = [prepare_layer_params(p) for p in params]          # once, un-jitted

        fwd = jax.jit(lambda xx, ws: transformer_forward(
            xx, ws, heads, q_tile=q_tile, kv_tile=kv_tile))
        out = jax.block_until_ready(fwd(x, prepared))

        ref = ref_transformer(x, params, heads)
        assert out.shape == (seq, batch, width)
        max_err = float(jnp.max(jnp.abs(out - ref)))
        assert jnp.allclose(out, ref, rtol=2e-2, atol=2e-2), (
            f"mismatch vs reference (max abs err {max_err})")

    # Case 1: single q-tile / single kv-block path (plus input/output HBM aliasing).
    run_case(seq=8, batch=2, width=32, heads=4, layers=2)
    # Case 2: exercises the hoisted K/V init (n_q=2) and the online-softmax KV loop
    # (n_kv=4) with multi-tile output writes.
    run_case(seq=32, batch=2, width=32, heads=4, layers=2, q_tile=16, kv_tile=8)

    print("KERNEL_OK")
</pallas_src>

<mosaic_0001>
module attributes {stable_mosaic.version = 11 : i64} {
  func.func @kernel(%arg0: i32, %arg1: i32, %arg2: memref<1x8x32xf32, #tpu.memory_space<vmem>>, %arg3: memref<1x32xf32, #tpu.memory_space<vmem>>, %arg4: memref<1x32xf32, #tpu.memory_space<vmem>>, %arg5: memref<32x32xbf16, #tpu.memory_space<vmem>>, %arg6: memref<1x32xf32, #tpu.memory_space<vmem>>, %arg7: memref<32x32xbf16, #tpu.memory_space<vmem>>, %arg8: memref<1x32xf32, #tpu.memory_space<vmem>>, %arg9: memref<32x32xbf16, #tpu.memory_space<vmem>>, %arg10: memref<1x32xf32, #tpu.memory_space<vmem>>, %arg11: memref<32x32xbf16, #tpu.memory_space<vmem>>, %arg12: memref<1x32xf32, #tpu.memory_space<vmem>>, %arg13: memref<1x32xf32, #tpu.memory_space<vmem>>, %arg14: memref<1x32xf32, #tpu.memory_space<vmem>>, %arg15: memref<32x128xbf16, #tpu.memory_space<vmem>>, %arg16: memref<1x128xf32, #tpu.memory_space<vmem>>, %arg17: memref<128x32xbf16, #tpu.memory_space<vmem>>, %arg18: memref<1x32xf32, #tpu.memory_space<vmem>>, %arg19: memref<1x8x32xf32, #tpu.memory_space<vmem>>, %arg20: memref<4x8x8xbf16, #tpu.memory_space<vmem>>, %arg21: memref<4x8x8xbf16, #tpu.memory_space<vmem>>, %arg22: memref<4x8x8xbf16, #tpu.memory_space<vmem>>) attributes {dimension_semantics = [#tpu.dimension_semantics<parallel>, #tpu.dimension_semantics<arbitrary>], iteration_bounds = array<i64: 2, 1>, scalar_prefetch = 0 : i64, scratch_operands = 3 : i64, tpu.core_type = #tpu.core_type<tc>, window_params = [{transform_indices = @transform_0, window_bounds = array<i64: 1, 8, 32>}, {pipeline_mode = #tpu.pipeline_mode<synchronous>, transform_indices = @transform_1, window_bounds = array<i64: 1, 32>}, {pipeline_mode = #tpu.pipeline_mode<synchronous>, transform_indices = @transform_2, window_bounds = array<i64: 1, 32>}, {pipeline_mode = #tpu.pipeline_mode<synchronous>, transform_indices = @transform_3, window_bounds = array<i64: 32, 32>}, {pipeline_mode = #tpu.pipeline_mode<synchronous>, transform_indices = @transform_4, window_bounds = array<i64: 1, 32>}, {pipeline_mode = #tpu.pipeline_mode<synchronous>, transform_indices = @transform_5, window_bounds = array<i64: 32, 32>}, {pipeline_mode = #tpu.pipeline_mode<synchronous>, transform_indices = @transform_6, window_bounds = array<i64: 1, 32>}, {pipeline_mode = #tpu.pipeline_mode<synchronous>, transform_indices = @transform_7, window_bounds = array<i64: 32, 32>}, {pipeline_mode = #tpu.pipeline_mode<synchronous>, transform_indices = @transform_8, window_bounds = array<i64: 1, 32>}, {pipeline_mode = #tpu.pipeline_mode<synchronous>, transform_indices = @transform_9, window_bounds = array<i64: 32, 32>}, {pipeline_mode = #tpu.pipeline_mode<synchronous>, transform_indices = @transform_10, window_bounds = array<i64: 1, 32>}, {pipeline_mode = #tpu.pipeline_mode<synchronous>, transform_indices = @transform_11, window_bounds = array<i64: 1, 32>}, {pipeline_mode = #tpu.pipeline_mode<synchronous>, transform_indices = @transform_12, window_bounds = array<i64: 1, 32>}, {pipeline_mode = #tpu.pipeline_mode<synchronous>, transform_indices = @transform_13, window_bounds = array<i64: 32, 128>}, {pipeline_mode = #tpu.pipeline_mode<synchronous>, transform_indices = @transform_14, window_bounds = array<i64: 1, 128>}, {pipeline_mode = #tpu.pipeline_mode<synchronous>, transform_indices = @transform_15, window_bounds = array<i64: 128, 32>}, {pipeline_mode = #tpu.pipeline_mode<synchronous>, transform_indices = @transform_16, window_bounds = array<i64: 1, 32>}, {transform_indices = @transform_17, window_bounds = array<i64: 1, 8, 32>}]} {
    %c0 = arith.constant 0 : index
    %c0_0 = arith.constant 0 : index
    %c0_1 = arith.constant 0 : index
    %0 = vector.load %arg2[%c0, %c0_0, %c0_1] : memref<1x8x32xf32, #tpu.memory_space<vmem>>, vector<1x8x32xf32>
    %1 = vector.shape_cast %0 : vector<1x8x32xf32> to vector<8x32xf32>
    %cst = arith.constant dense<0.000000e+00> : vector<8xf32>
    %2 = vector.multi_reduction <add>, %1, %cst [1] : vector<8x32xf32> to vector<8xf32>
    %3 = vector.shape_cast %2 : vector<8xf32> to vector<8x1xf32>
    %cst_2 = arith.constant 3.200000e+01 : f32
    %4 = vector.broadcast %cst_2 : f32 to vector<8x1xf32>
    %5 = arith.divf %3, %4 : vector<8x1xf32>
    %6 = vector.broadcast %5 : vector<8x1xf32> to vector<8x32xf32>
    %7 = arith.subf %1, %6 : vector<8x32xf32>
    %8 = arith.mulf %7, %7 : vector<8x32xf32>
    %cst_3 = arith.constant dense<0.000000e+00> : vector<8xf32>
    %9 = vector.multi_reduction <add>, %8, %cst_3 [1] : vector<8x32xf32> to vector<8xf32>
    %10 = vector.shape_cast %9 : vector<8xf32> to vector<8x1xf32>
    %cst_4 = arith.constant 3.200000e+01 : f32
    %11 = vector.broadcast %cst_4 : f32 to vector<8x1xf32>
    %12 = arith.divf %10, %11 : vector<8x1xf32>
    %13 = vector.broadcast %5 : vector<8x1xf32> to vector<8x32xf32>
    %14 = arith.subf %1, %13 : vector<8x32xf32>
    %cst_5 = arith.constant 9.99999974E-6 : f32
    %15 = vector.broadcast %cst_5 : f32 to vector<8x1xf32>
    %16 = arith.addf %12, %15 : vector<8x1xf32>
    %17 = math.rsqrt %16 : vector<8x1xf32>
    %18 = vector.broadcast %17 : vector<8x1xf32> to vector<8x32xf32>
    %19 = arith.mulf %14, %18 : vector<8x32xf32>
    %c0_6 = arith.constant 0 : index
    %c0_7 = arith.constant 0 : index
    %20 = vector.load %arg3[%c0_6, %c0_7] : memref<1x32xf32, #tpu.memory_space<vmem>>, vector<1x32xf32>
    %21 = vector.shape_cast %20 : vector<1x32xf32> to vector<32xf32>
    %22 = vector.shape_cast %21 : vector<32xf32> to vector<1x32xf32>
    %23 = vector.broadcast %22 : vector<1x32xf32> to vector<8x32xf32>
    %24 = arith.mulf %19, %23 : vector<8x32xf32>
    %c0_8 = arith.constant 0 : index
    %c0_9 = arith.constant 0 : index
    %25 = vector.load %arg4[%c0_8, %c0_9] : memref<1x32xf32, #tpu.memory_space<vmem>>, vector<1x32xf32>
    %26 = vector.shape_cast %25 : vector<1x32xf32> to vector<32xf32>
    %27 = vector.shape_cast %26 : vector<32xf32> to vector<1x32xf32>
    %28 = vector.broadcast %27 : vector<1x32xf32> to vector<8x32xf32>
    %29 = arith.addf %24, %28 : vector<8x32xf32>
    %30 = arith.truncf %29 : vector<8x32xf32> to vector<8x32xbf16>
    %c0_10 = arith.constant 0 : index
    %c0_11 = arith.constant 0 : index
    %31 = vector.load %arg7[%c0_10, %c0_11] : memref<32x32xbf16, #tpu.memory_space<vmem>>, vector<32x32xbf16>
    %cst_12 = arith.constant dense<0.000000e+00> : vector<8x32xf32>
    %32 = tpu.matmul %30, %31, %cst_12 {dimension_numbers = #tpu.dot_dimension_numbers<[1], [0], [0], [1], [0, 0, 1, 1], [], []>} : vector<8x32xbf16>, vector<32x32xbf16>, vector<8x32xf32> -> vector<8x32xf32>
    %c0_13 = arith.constant 0 : index
    %c0_14 = arith.constant 0 : index
    %33 = vector.load %arg8[%c0_13, %c0_14] : memref<1x32xf32, #tpu.memory_space<vmem>>, vector<1x32xf32>
    %34 = vector.shape_cast %33 : vector<1x32xf32> to vector<32xf32>
    %35 = vector.shape_cast %34 : vector<32xf32> to vector<1x32xf32>
    %36 = vector.broadcast %35 : vector<1x32xf32> to vector<8x32xf32>
    %37 = arith.addf %32, %36 : vector<8x32xf32>
    %c0_15 = arith.constant 0 : index
    %c0_16 = arith.constant 0 : index
    %38 = vector.load %arg9[%c0_15, %c0_16] : memref<32x32xbf16, #tpu.memory_space<vmem>>, vector<32x32xbf16>
    %cst_17 = arith.constant dense<0.000000e+00> : vector<8x32xf32>
    %39 = tpu.matmul %30, %38, %cst_17 {dimension_numbers = #tpu.dot_dimension_numbers<[1], [0], [0], [1], [0, 0, 1, 1], [], []>} : vector<8x32xbf16>, vector<32x32xbf16>, vector<8x32xf32> -> vector<8x32xf32>
    %c0_18 = arith.constant 0 : index
    %c0_19 = arith.constant 0 : index
    %40 = vector.load %arg10[%c0_18, %c0_19] : memref<1x32xf32, #tpu.memory_space<vmem>>, vector<1x32xf32>
    %41 = vector.shape_cast %40 : vector<1x32xf32> to vector<32xf32>
    %42 = vector.shape_cast %41 : vector<32xf32> to vector<1x32xf32>
    %43 = vector.broadcast %42 : vector<1x32xf32> to vector<8x32xf32>
    %44 = arith.addf %39, %43 : vector<8x32xf32>
    %45 = arith.truncf %37 : vector<8x32xf32> to vector<8x32xbf16>
    %46 = arith.truncf %44 : vector<8x32xf32> to vector<8x32xbf16>
    %47 = vector.extract_strided_slice %45 {offsets = [0, 0], sizes = [8, 8], strides = [1, 1]} : vector<8x32xbf16> to vector<8x8xbf16>
    %c0_20 = arith.constant 0 : index
    %c0_21 = arith.constant 0 : index
    %c0_22 = arith.constant 0 : index
    %48 = vector.load %arg21[%c0_20, %c0_21, %c0_22] : memref<4x8x8xbf16, #tpu.memory_space<vmem>>, vector<1x8x8xbf16>
    %49 = vector.shape_cast %48 : vector<1x8x8xbf16> to vector<8x8xbf16>
    %50 = vector.shape_cast %47 : vector<8x8xbf16> to vector<1x8x8xbf16>
    tpu.vector_store %arg21[%c0_20, %c0_21, %c0_22], %50 {strides = array<i32>} : memref<4x8x8xbf16, #tpu.memory_space<vmem>>, vector<1x8x8xbf16>,
    %51 = vector.extract_strided_slice %46 {offsets = [0, 0], sizes = [8, 8], strides = [1, 1]} : vector<8x32xbf16> to vector<8x8xbf16>
    %c0_23 = arith.constant 0 : index
    %c0_24 = arith.constant 0 : index
    %c0_25 = arith.constant 0 : index
    %52 = vector.load %arg22[%c0_23, %c0_24, %c0_25] : memref<4x8x8xbf16, #tpu.memory_space<vmem>>, vector<1x8x8xbf16>
    %53 = vector.shape_cast %52 : vector<1x8x8xbf16> to vector<8x8xbf16>
    %54 = vector.shape_cast %51 : vector<8x8xbf16> to vector<1x8x8xbf16>
    tpu.vector_store %arg22[%c0_23, %c0_24, %c0_25], %54 {strides = array<i32>} : memref<4x8x8xbf16, #tpu.memory_space<vmem>>, vector<1x8x8xbf16>,
    %55 = vector.extract_strided_slice %45 {offsets = [0, 8], sizes = [8, 8], strides = [1, 1]} : vector<8x32xbf16> to vector<8x8xbf16>
    %c1 = arith.constant 1 : index
    %c0_26 = arith.constant 0 : index
    %c0_27 = arith.constant 0 : index
    %56 = vector.load %arg21[%c1, %c0_26, %c0_27] : memref<4x8x8xbf16, #tpu.memory_space<vmem>>, vector<1x8x8xbf16>
    %57 = vector.shape_cast %56 : vector<1x8x8xbf16> to vector<8x8xbf16>
    %58 = vector.shape_cast %55 : vector<8x8xbf16> to vector<1x8x8xbf16>
    tpu.vector_store %arg21[%c1, %c0_26, %c0_27], %58 {strides = array<i32>} : memref<4x8x8xbf16, #tpu.memory_space<vmem>>, vector<1x8x8xbf16>,
    %59 = vector.extract_strided_slice %46 {offsets = [0, 8], sizes = [8, 8], strides = [1, 1]} : vector<8x32xbf16> to vector<8x8xbf16>
    %c1_28 = arith.constant 1 : index
    %c0_29 = arith.constant 0 : index
    %c0_30 = arith.constant 0 : index
    %60 = vector.load %arg22[%c1_28, %c0_29, %c0_30] : memref<4x8x8xbf16, #tpu.memory_space<vmem>>, vector<1x8x8xbf16>
    %61 = vector.shape_cast %60 : vector<1x8x8xbf16> to vector<8x8xbf16>
    %62 = vector.shape_cast %59 : vector<8x8xbf16> to vector<1x8x8xbf16>
    tpu.vector_store %arg22[%c1_28, %c0_29, %c0_30], %62 {strides = array<i32>} : memref<4x8x8xbf16, #tpu.memory_space<vmem>>, vector<1x8x8xbf16>,
    %63 = vector.extract_strided_slice %45 {offsets = [0, 16], sizes = [8, 8], strides = [1, 1]} : vector<8x32xbf16> to vector<8x8xbf16>
    %c2 = arith.constant 2 : index
    %c0_31 = arith.constant 0 : index
    %c0_32 = arith.constant 0 : index
    %64 = vector.load %arg21[%c2, %c0_31, %c0_32] : memref<4x8x8xbf16, #tpu.memory_space<vmem>>, vector<1x8x8xbf16>
    %65 = vector.shape_cast %64 : vector<1x8x8xbf16> to vector<8x8xbf16>
    %66 = vector.shape_cast %63 : vector<8x8xbf16> to vector<1x8x8xbf16>
    tpu.vector_store %arg21[%c2, %c0_31, %c0_32], %66 {strides = array<i32>} : memref<4x8x8xbf16, #tpu.memory_space<vmem>>, vector<1x8x8xbf16>,
    %67 = vector.extract_strided_slice %46 {offsets = [0, 16], sizes = [8, 8], strides = [1, 1]} : vector<8x32xbf16> to vector<8x8xbf16>
    %c2_33 = arith.constant 2 : index
    %c0_34 = arith.constant 0 : index
    %c0_35 = arith.constant 0 : index
    %68 = vector.load %arg22[%c2_33, %c0_34, %c0_35] : memref<4x8x8xbf16, #tpu.memory_space<vmem>>, vector<1x8x8xbf16>
    %69 = vector.shape_cast %68 : vector<1x8x8xbf16> to vector<8x8xbf16>
    %70 = vector.shape_cast %67 : vector<8x8xbf16> to vector<1x8x8xbf16>
    tpu.vector_store %arg22[%c2_33, %c0_34, %c0_35], %70 {strides = array<i32>} : memref<4x8x8xbf16, #tpu.memory_space<vmem>>, vector<1x8x8xbf16>,
    %71 = vector.extract_strided_slice %45 {offsets = [0, 24], sizes = [8, 8], strides = [1, 1]} : vector<8x32xbf16> to vector<8x8xbf16>
    %c3 = arith.constant 3 : index
    %c0_36 = arith.constant 0 : index
    %c0_37 = arith.constant 0 : index
    %72 = vector.load %arg21[%c3, %c0_36, %c0_37] : memref<4x8x8xbf16, #tpu.memory_space<vmem>>, vector<1x8x8xbf16>
    %73 = vector.shape_cast %72 : vector<1x8x8xbf16> to vector<8x8xbf16>
    %74 = vector.shape_cast %71 : vector<8x8xbf16> to vector<1x8x8xbf16>
    tpu.vector_store %arg21[%c3, %c0_36, %c0_37], %74 {strides = array<i32>} : memref<4x8x8xbf16, #tpu.memory_space<vmem>>, vector<1x8x8xbf16>,
    %75 = vector.extract_strided_slice %46 {offsets = [0, 24], sizes = [8, 8], strides = [1, 1]} : vector<8x32xbf16> to vector<8x8xbf16>
    %c3_38 = arith.constant 3 : index
    %c0_39 = arith.constant 0 : index
    %c0_40 = arith.constant 0 : index
    %76 = vector.load %arg22[%c3_38, %c0_39, %c0_40] : memref<4x8x8xbf16, #tpu.memory_space<vmem>>, vector<1x8x8xbf16>
    %77 = vector.shape_cast %76 : vector<1x8x8xbf16> to vector<8x8xbf16>
    %78 = vector.shape_cast %75 : vector<8x8xbf16> to vector<1x8x8xbf16>
    tpu.vector_store %arg22[%c3_38, %c0_39, %c0_40], %78 {strides = array<i32>} : memref<4x8x8xbf16, #tpu.memory_space<vmem>>, vector<1x8x8xbf16>,
    %79 = arith.truncf %29 : vector<8x32xf32> to vector<8x32xbf16>
    %c0_41 = arith.constant 0 : index
    %c0_42 = arith.constant 0 : index
    %80 = vector.load %arg5[%c0_41, %c0_42] : memref<32x32xbf16, #tpu.memory_space<vmem>>, vector<32x32xbf16>
    %cst_43 = arith.constant dense<0.000000e+00> : vector<8x32xf32>
    %81 = tpu.matmul %79, %80, %cst_43 {dimension_numbers = #tpu.dot_dimension_numbers<[1], [0], [0], [1], [0, 0, 1, 1], [], []>} : vector<8x32xbf16>, vector<32x32xbf16>, vector<8x32xf32> -> vector<8x32xf32>
    %c0_44 = arith.constant 0 : index
    %c0_45 = arith.constant 0 : index
    %82 = vector.load %arg6[%c0_44, %c0_45] : memref<1x32xf32, #tpu.memory_space<vmem>>, vector<1x32xf32>
    %83 = vector.shape_cast %82 : vector<1x32xf32> to vector<32xf32>
    %84 = vector.shape_cast %83 : vector<32xf32> to vector<1x32xf32>
    %85 = vector.broadcast %84 : vector<1x32xf32> to vector<8x32xf32>
    %86 = arith.addf %81, %85 : vector<8x32xf32>
    %cst_46 = arith.constant 0.353553385 : f32
    %87 = vector.broadcast %cst_46 : f32 to vector<8x32xf32>
    %88 = arith.mulf %86, %87 : vector<8x32xf32>
    %89 = arith.truncf %88 : vector<8x32xf32> to vector<8x32xbf16>
    %90 = vector.extract_strided_slice %89 {offsets = [0, 0], sizes = [8, 8], strides = [1, 1]} : vector<8x32xbf16> to vector<8x8xbf16>
    %c0_47 = arith.constant 0 : index
    %c0_48 = arith.constant 0 : index
    %c0_49 = arith.constant 0 : index
    %91 = vector.load %arg20[%c0_47, %c0_48, %c0_49] : memref<4x8x8xbf16, #tpu.memory_space<vmem>>, vector<1x8x8xbf16>
    %92 = vector.shape_cast %91 : vector<1x8x8xbf16> to vector<8x8xbf16>
    %93 = vector.shape_cast %90 : vector<8x8xbf16> to vector<1x8x8xbf16>
    tpu.vector_store %arg20[%c0_47, %c0_48, %c0_49], %93 {strides = array<i32>} : memref<4x8x8xbf16, #tpu.memory_space<vmem>>, vector<1x8x8xbf16>,
    %94 = vector.extract_strided_slice %89 {offsets = [0, 8], sizes = [8, 8], strides = [1, 1]} : vector<8x32xbf16> to vector<8x8xbf16>
    %c1_50 = arith.constant 1 : index
    %c0_51 = arith.constant 0 : index
    %c0_52 = arith.constant 0 : index
    %95 = vector.load %arg20[%c1_50, %c0_51, %c0_52] : memref<4x8x8xbf16, #tpu.memory_space<vmem>>, vector<1x8x8xbf16>
    %96 = vector.shape_cast %95 : vector<1x8x8xbf16> to vector<8x8xbf16>
    %97 = vector.shape_cast %94 : vector<8x8xbf16> to vector<1x8x8xbf16>
    tpu.vector_store %arg20[%c1_50, %c0_51, %c0_52], %97 {strides = array<i32>} : memref<4x8x8xbf16, #tpu.memory_space<vmem>>, vector<1x8x8xbf16>,
    %98 = vector.extract_strided_slice %89 {offsets = [0, 16], sizes = [8, 8], strides = [1, 1]} : vector<8x32xbf16> to vector<8x8xbf16>
    %c2_53 = arith.constant 2 : index
    %c0_54 = arith.constant 0 : index
    %c0_55 = arith.constant 0 : index
    %99 = vector.load %arg20[%c2_53, %c0_54, %c0_55] : memref<4x8x8xbf16, #tpu.memory_space<vmem>>, vector<1x8x8xbf16>
    %100 = vector.shape_cast %99 : vector<1x8x8xbf16> to vector<8x8xbf16>
    %101 = vector.shape_cast %98 : vector<8x8xbf16> to vector<1x8x8xbf16>
    tpu.vector_store %arg20[%c2_53, %c0_54, %c0_55], %101 {strides = array<i32>} : memref<4x8x8xbf16, #tpu.memory_space<vmem>>, vector<1x8x8xbf16>,
    %102 = vector.extract_strided_slice %89 {offsets = [0, 24], sizes = [8, 8], strides = [1, 1]} : vector<8x32xbf16> to vector<8x8xbf16>
    %c3_56 = arith.constant 3 : index
    %c0_57 = arith.constant 0 : index
    %c0_58 = arith.constant 0 : index
    %103 = vector.load %arg20[%c3_56, %c0_57, %c0_58] : memref<4x8x8xbf16, #tpu.memory_space<vmem>>, vector<1x8x8xbf16>
    %104 = vector.shape_cast %103 : vector<1x8x8xbf16> to vector<8x8xbf16>
    %105 = vector.shape_cast %102 : vector<8x8xbf16> to vector<1x8x8xbf16>
    tpu.vector_store %arg20[%c3_56, %c0_57, %c0_58], %105 {strides = array<i32>} : memref<4x8x8xbf16, #tpu.memory_space<vmem>>, vector<1x8x8xbf16>,
    %c0_59 = arith.constant 0 : index
    %c0_60 = arith.constant 0 : index
    %c0_61 = arith.constant 0 : index
    %106 = vector.load %arg20[%c0_59, %c0_60, %c0_61] : memref<4x8x8xbf16, #tpu.memory_space<vmem>>, vector<4x8x8xbf16>
    %c0_62 = arith.constant 0 : index
    %c0_63 = arith.constant 0 : index
    %c0_64 = arith.constant 0 : index
    %107 = vector.load %arg21[%c0_62, %c0_63, %c0_64] : memref<4x8x8xbf16, #tpu.memory_space<vmem>>, vector<4x8x8xbf16>
    %c0_65 = arith.constant 0 : index
    %c0_66 = arith.constant 0 : index
    %c0_67 = arith.constant 0 : index
    %108 = vector.load %arg22[%c0_65, %c0_66, %c0_67] : memref<4x8x8xbf16, #tpu.memory_space<vmem>>, vector<4x8x8xbf16>
    "tpu.trace_start"() <{level = 10 : i32, message = "hqd,hkd->hqk"}> : () -> ()
    %cst_68 = arith.constant dense<0.000000e+00> : vector<4x8x8xf32>
    %109 = tpu.matmul %106, %107, %cst_68 {dimension_numbers = #tpu.dot_dimension_numbers<[2], [2], [1], [1], [0, 0, 0, 1, 1, 1], [0], [0]>} : vector<4x8x8xbf16>, vector<4x8x8xbf16>, vector<4x8x8xf32> -> vector<4x8x8xf32>
    "tpu.trace_stop"() : () -> ()
    %cst_69 = arith.constant dense<0xFF800000> : vector<4x8xf32>
    %110 = vector.multi_reduction <maximumf>, %109, %cst_69 [2] : vector<4x8x8xf32> to vector<4x8xf32>
    %111 = vector.shape_cast %110 : vector<4x8xf32> to vector<4x8x1xf32>
    %112 = vector.broadcast %111 : vector<4x8x1xf32> to vector<4x8x8xf32>
    %113 = arith.subf %109, %112 : vector<4x8x8xf32>
    %114 = math.exp %113 : vector<4x8x8xf32>
    %cst_70 = arith.constant dense<0.000000e+00> : vector<4x8xf32>
    %115 = vector.multi_reduction <add>, %114, %cst_70 [2] : vector<4x8x8xf32> to vector<4x8xf32>
    %116 = vector.shape_cast %115 : vector<4x8xf32> to vector<4x8x1xf32>
    %117 = tpu.reciprocal %116 {approx = true} : vector<4x8x1xf32> -> vector<4x8x1xf32>
    %118 = vector.broadcast %117 : vector<4x8x1xf32> to vector<4x8x8xf32>
    %119 = arith.mulf %114, %118 : vector<4x8x8xf32>
    %120 = arith.truncf %119 : vector<4x8x8xf32> to vector<4x8x8xbf16>
    "tpu.trace_start"() <{level = 10 : i32, message = "hqk,hkd->hqd"}> : () -> ()
    %cst_71 = arith.constant dense<0.000000e+00> : vector<4x8x8xf32>
    %121 = tpu.matmul %120, %108, %cst_71 {dimension_numbers = #tpu.dot_dimension_numbers<[2], [1], [1], [2], [0, 0, 0, 1, 1, 2], [0], [0]>} : vector<4x8x8xbf16>, vector<4x8x8xbf16>, vector<4x8x8xf32> -> vector<4x8x8xf32>
    "tpu.trace_stop"() : () -> ()
    %122 = arith.truncf %121 : vector<4x8x8xf32> to vector<4x8x8xbf16>
    %c0_72 = arith.constant 0 : index
    %c0_73 = arith.constant 0 : index
    %123 = vector.load %arg12[%c0_72, %c0_73] : memref<1x32xf32, #tpu.memory_space<vmem>>, vector<1x32xf32>
    %124 = vector.shape_cast %123 : vector<1x32xf32> to vector<32xf32>
    %125 = vector.extract_strided_slice %122 {offsets = [0, 0, 0], sizes = [1, 8, 8], strides = [1, 1, 1]} : vector<4x8x8xbf16> to vector<1x8x8xbf16>
    %126 = vector.shape_cast %125 : vector<1x8x8xbf16> to vector<8x8xbf16>
    %c0_74 = arith.constant 0 : index
    %c0_75 = arith.constant 0 : index
    %127 = vector.load %arg11[%c0_74, %c0_75] : memref<32x32xbf16, #tpu.memory_space<vmem>>, vector<8x32xbf16>
    %cst_76 = arith.constant dense<0.000000e+00> : vector<8x32xf32>
    %128 = tpu.matmul %126, %127, %cst_76 {dimension_numbers = #tpu.dot_dimension_numbers<[1], [0], [0], [1], [0, 0, 1, 1], [], []>} : vector<8x8xbf16>, vector<8x32xbf16>, vector<8x32xf32> -> vector<8x32xf32>
    %129 = vector.shape_cast %124 : vector<32xf32> to vector<1x32xf32>
    %130 = vector.broadcast %129 : vector<1x32xf32> to vector<8x32xf32>
    %131 = arith.addf %130, %128 : vector<8x32xf32>
    %132 = vector.extract_strided_slice %122 {offsets = [1, 0, 0], sizes = [1, 8, 8], strides = [1, 1, 1]} : vector<4x8x8xbf16> to vector<1x8x8xbf16>
    %133 = vector.shape_cast %132 : vector<1x8x8xbf16> to vector<8x8xbf16>
    %c8 = arith.constant 8 : index
    %c0_77 = arith.constant 0 : index
    %134 = vector.load %arg11[%c8, %c0_77] : memref<32x32xbf16, #tpu.memory_space<vmem>>, vector<8x32xbf16>
    %cst_78 = arith.constant dense<0.000000e+00> : vector<8x32xf32>
    %135 = tpu.matmul %133, %134, %cst_78 {dimension_numbers = #tpu.dot_dimension_numbers<[1], [0], [0], [1], [0, 0, 1, 1], [], []>} : vector<8x8xbf16>, vector<8x32xbf16>, vector<8x32xf32> -> vector<8x32xf32>
    %136 = arith.addf %131, %135 : vector<8x32xf32>
    %137 = vector.extract_strided_slice %122 {offsets = [2, 0, 0], sizes = [1, 8, 8], strides = [1, 1, 1]} : vector<4x8x8xbf16> to vector<1x8x8xbf16>
    %138 = vector.shape_cast %137 : vector<1x8x8xbf16> to vector<8x8xbf16>
    %c16 = arith.constant 16 : index
    %c0_79 = arith.constant 0 : index
    %139 = vector.load %arg11[%c16, %c0_79] : memref<32x32xbf16, #tpu.memory_space<vmem>>, vector<8x32xbf16>
    %cst_80 = arith.constant dense<0.000000e+00> : vector<8x32xf32>
    %140 = tpu.matmul %138, %139, %cst_80 {dimension_numbers = #tpu.dot_dimension_numbers<[1], [0], [0], [1], [0, 0, 1, 1], [], []>} : vector<8x8xbf16>, vector<8x32xbf16>, vector<8x32xf32> -> vector<8x32xf32>
    %141 = arith.addf %136, %140 : vector<8x32xf32>
    %142 = vector.extract_strided_slice %122 {offsets = [3, 0, 0], sizes = [1, 8, 8], strides = [1, 1, 1]} : vector<4x8x8xbf16> to vector<1x8x8xbf16>
    %143 = vector.shape_cast %142 : vector<1x8x8xbf16> to vector<8x8xbf16>
    %c24 = arith.constant 24 : index
    %c0_81 = arith.constant 0 : index
    %144 = vector.load %arg11[%c24, %c0_81] : memref<32x32xbf16, #tpu.memory_space<vmem>>, vector<8x32xbf16>
    %cst_82 = arith.constant dense<0.000000e+00> : vector<8x32xf32>
    %145 = tpu.matmul %143, %144, %cst_82 {dimension_numbers = #tpu.dot_dimension_numbers<[1], [0], [0], [1], [0, 0, 1, 1], [], []>} : vector<8x8xbf16>, vector<8x32xbf16>, vector<8x32xf32> -> vector<8x32xf32>
    %146 = arith.addf %141, %145 : vector<8x32xf32>
    %147 = arith.addf %1, %146 : vector<8x32xf32>
    %cst_83 = arith.constant dense<0.000000e+00> : vector<8xf32>
    %148 = vector.multi_reduction <add>, %147, %cst_83 [1] : vector<8x32xf32> to vector<8xf32>
    %149 = vector.shape_cast %148 : vector<8xf32> to vector<8x1xf32>
    %cst_84 = arith.constant 3.200000e+01 : f32
    %150 = vector.broadcast %cst_84 : f32 to vector<8x1xf32>
    %151 = arith.divf %149, %150 : vector<8x1xf32>
    %152 = vector.broadcast %151 : vector<8x1xf32> to vector<8x32xf32>
    %153 = arith.subf %147, %152 : vector<8x32xf32>
    %154 = arith.mulf %153, %153 : vector<8x32xf32>
    %cst_85 = arith.constant dense<0.000000e+00> : vector<8xf32>
    %155 = vector.multi_reduction <add>, %154, %cst_85 [1] : vector<8x32xf32> to vector<8xf32>
    %156 = vector.shape_cast %155 : vector<8xf32> to vector<8x1xf32>
    %cst_86 = arith.constant 3.200000e+01 : f32
    %157 = vector.broadcast %cst_86 : f32 to vector<8x1xf32>
    %158 = arith.divf %156, %157 : vector<8x1xf32>
    %159 = vector.broadcast %151 : vector<8x1xf32> to vector<8x32xf32>
    %160 = arith.subf %147, %159 : vector<8x32xf32>
    %cst_87 = arith.constant 9.99999974E-6 : f32
    %161 = vector.broadcast %cst_87 : f32 to vector<8x1xf32>
    %162 = arith.addf %158, %161 : vector<8x1xf32>
    %163 = math.rsqrt %162 : vector<8x1xf32>
    %164 = vector.broadcast %163 : vector<8x1xf32> to vector<8x32xf32>
    %165 = arith.mulf %160, %164 : vector<8x32xf32>
    %c0_88 = arith.constant 0 : index
    %c0_89 = arith.constant 0 : index
    %166 = vector.load %arg13[%c0_88, %c0_89] : memref<1x32xf32, #tpu.memory_space<vmem>>, vector<1x32xf32>
    %167 = vector.shape_cast %166 : vector<1x32xf32> to vector<32xf32>
    %168 = vector.shape_cast %167 : vector<32xf32> to vector<1x32xf32>
    %169 = vector.broadcast %168 : vector<1x32xf32> to vector<8x32xf32>
    %170 = arith.mulf %165, %169 : vector<8x32xf32>
    %c0_90 = arith.constant 0 : index
    %c0_91 = arith.constant 0 : index
    %171 = vector.load %arg14[%c0_90, %c0_91] : memref<1x32xf32, #tpu.memory_space<vmem>>, vector<1x32xf32>
    %172 = vector.shape_cast %171 : vector<1x32xf32> to vector<32xf32>
    %173 = vector.shape_cast %172 : vector<32xf32> to vector<1x32xf32>
    %174 = vector.broadcast %173 : vector<1x32xf32> to vector<8x32xf32>
    %175 = arith.addf %170, %174 : vector<8x32xf32>
    %176 = arith.truncf %175 : vector<8x32xf32> to vector<8x32xbf16>
    %c0_92 = arith.constant 0 : index
    %c0_93 = arith.constant 0 : index
    %177 = vector.load %arg15[%c0_92, %c0_93] : memref<32x128xbf16, #tpu.memory_space<vmem>>, vector<32x128xbf16>
    %cst_94 = arith.constant dense<0.000000e+00> : vector<8x128xf32>
    %178 = tpu.matmul %176, %177, %cst_94 {dimension_numbers = #tpu.dot_dimension_numbers<[1], [0], [0], [1], [0, 0, 1, 1], [], []>} : vector<8x32xbf16>, vector<32x128xbf16>, vector<8x128xf32> -> vector<8x128xf32>
    %c0_95 = arith.constant 0 : index
    %c0_96 = arith.constant 0 : index
    %179 = vector.load %arg16[%c0_95, %c0_96] : memref<1x128xf32, #tpu.memory_space<vmem>>, vector<1x128xf32>
    %180 = vector.shape_cast %179 : vector<1x128xf32> to vector<128xf32>
    %181 = vector.shape_cast %180 : vector<128xf32> to vector<1x128xf32>
    %182 = vector.broadcast %181 : vector<1x128xf32> to vector<8x128xf32>
    %183 = arith.addf %178, %182 : vector<8x128xf32>
    %cst_97 = arith.constant 1.702000e+00 : f32
    %184 = vector.broadcast %cst_97 : f32 to vector<8x128xf32>
    %185 = arith.mulf %184, %183 : vector<8x128xf32>
    %186 = arith.negf %185 : vector<8x128xf32>
    %187 = math.exp %186 : vector<8x128xf32>
    %cst_98 = arith.constant 1.000000e+00 : f32
    %188 = vector.broadcast %cst_98 : f32 to vector<8x128xf32>
    %189 = arith.addf %188, %187 : vector<8x128xf32>
    %190 = arith.divf %188, %189 : vector<8x128xf32>
    %191 = arith.mulf %183, %190 : vector<8x128xf32>
    %192 = arith.truncf %191 : vector<8x128xf32> to vector<8x128xbf16>
    %c0_99 = arith.constant 0 : index
    %c0_100 = arith.constant 0 : index
    %193 = vector.load %arg17[%c0_99, %c0_100] : memref<128x32xbf16, #tpu.memory_space<vmem>>, vector<128x32xbf16>
    %cst_101 = arith.constant dense<0.000000e+00> : vector<8x32xf32>
    %194 = tpu.matmul %192, %193, %cst_101 {dimension_numbers = #tpu.dot_dimension_numbers<[1], [0], [0], [1], [0, 0, 1, 1], [], []>} : vector<8x128xbf16>, vector<128x32xbf16>, vector<8x32xf32> -> vector<8x32xf32>
    %c0_102 = arith.constant 0 : index
    %c0_103 = arith.constant 0 : index
    %195 = vector.load %arg18[%c0_102, %c0_103] : memref<1x32xf32, #tpu.memory_space<vmem>>, vector<1x32xf32>
    %196 = vector.shape_cast %195 : vector<1x32xf32> to vector<32xf32>
    %197 = vector.shape_cast %196 : vector<32xf32> to vector<1x32xf32>
    %198 = vector.broadcast %197 : vector<1x32xf32> to vector<8x32xf32>
    %199 = arith.addf %194, %198 : vector<8x32xf32>
    %200 = arith.addf %147, %199 : vector<8x32xf32>
    %c0_104 = arith.constant 0 : index
    %c0_105 = arith.constant 0 : index
    %c0_106 = arith.constant 0 : index
    %201 = vector.load %arg19[%c0_104, %c0_105, %c0_106] : memref<1x8x32xf32, #tpu.memory_space<vmem>>, vector<1x8x32xf32>
    %202 = vector.shape_cast %201 : vector<1x8x32xf32> to vector<8x32xf32>
    %203 = vector.shape_cast %200 : vector<8x32xf32> to vector<1x8x32xf32>
    tpu.vector_store %arg19[%c0_104, %c0_105, %c0_106], %203 {strides = array<i32>} : memref<1x8x32xf32, #tpu.memory_space<vmem>>, vector<1x8x32xf32>,
    return
  }
  func.func @transform_0(%arg0: i32, %arg1: i32) -> (i32, i32, i32) {
    %c0_i32 = arith.constant 0 : i32
    %c0_i32_0 = arith.constant 0 : i32
    %c0_i32_1 = arith.constant 0 : i32
    return %arg0, %c0_i32, %c0_i32_0 : i32, i32, i32
  }
  func.func @transform_1(%arg0: i32, %arg1: i32) -> (i32, i32) {
    %c0_i32 = arith.constant 0 : i32
    %c0_i32_0 = arith.constant 0 : i32
    %c0_i32_1 = arith.constant 0 : i32
    return %c0_i32, %c0_i32_0 : i32, i32
  }
  func.func @transform_2(%arg0: i32, %arg1: i32) -> (i32, i32) {
    %c0_i32 = arith.constant 0 : i32
    %c0_i32_0 = arith.constant 0 : i32
    %c0_i32_1 = arith.constant 0 : i32
    return %c0_i32, %c0_i32_0 : i32, i32
  }
  func.func @transform_3(%arg0: i32, %arg1: i32) -> (i32, i32) {
    %c0_i32 = arith.constant 0 : i32
    %c0_i32_0 = arith.constant 0 : i32
    %c0_i32_1 = arith.constant 0 : i32
    return %c0_i32, %c0_i32_0 : i32, i32
  }
  func.func @transform_4(%arg0: i32, %arg1: i32) -> (i32, i32) {
    %c0_i32 = arith.constant 0 : i32
    %c0_i32_0 = arith.constant 0 : i32
    %c0_i32_1 = arith.constant 0 : i32
    return %c0_i32, %c0_i32_0 : i32, i32
  }
  func.func @transform_5(%arg0: i32, %arg1: i32) -> (i32, i32) {
    %c0_i32 = arith.constant 0 : i32
    %c0_i32_0 = arith.constant 0 : i32
    %c0_i32_1 = arith.constant 0 : i32
    return %c0_i32, %c0_i32_0 : i32, i32
  }
  func.func @transform_6(%arg0: i32, %arg1: i32) -> (i32, i32) {
    %c0_i32 = arith.constant 0 : i32
    %c0_i32_0 = arith.constant 0 : i32
    %c0_i32_1 = arith.constant 0 : i32
    return %c0_i32, %c0_i32_0 : i32, i32
  }
  func.func @transform_7(%arg0: i32, %arg1: i32) -> (i32, i32) {
    %c0_i32 = arith.constant 0 : i32
    %c0_i32_0 = arith.constant 0 : i32
    %c0_i32_1 = arith.constant 0 : i32
    return %c0_i32, %c0_i32_0 : i32, i32
  }
  func.func @transform_8(%arg0: i32, %arg1: i32) -> (i32, i32) {
    %c0_i32 = arith.constant 0 : i32
    %c0_i32_0 = arith.constant 0 : i32
    %c0_i32_1 = arith.constant 0 : i32
    return %c0_i32, %c0_i32_0 : i32, i32
  }
  func.func @transform_9(%arg0: i32, %arg1: i32) -> (i32, i32) {
    %c0_i32 = arith.constant 0 : i32
    %c0_i32_0 = arith.constant 0 : i32
    %c0_i32_1 = arith.constant 0 : i32
    return %c0_i32, %c0_i32_0 : i32, i32
  }
  func.func @transform_10(%arg0: i32, %arg1: i32) -> (i32, i32) {
    %c0_i32 = arith.constant 0 : i32
    %c0_i32_0 = arith.constant 0 : i32
    %c0_i32_1 = arith.constant 0 : i32
    return %c0_i32, %c0_i32_0 : i32, i32
  }
  func.func @transform_11(%arg0: i32, %arg1: i32) -> (i32, i32) {
    %c0_i32 = arith.constant 0 : i32
    %c0_i32_0 = arith.constant 0 : i32
    %c0_i32_1 = arith.constant 0 : i32
    return %c0_i32, %c0_i32_0 : i32, i32
  }
  func.func @transform_12(%arg0: i32, %arg1: i32) -> (i32, i32) {
    %c0_i32 = arith.constant 0 : i32
    %c0_i32_0 = arith.constant 0 : i32
    %c0_i32_1 = arith.constant 0 : i32
    return %c0_i32, %c0_i32_0 : i32, i32
  }
  func.func @transform_13(%arg0: i32, %arg1: i32) -> (i32, i32) {
    %c0_i32 = arith.constant 0 : i32
    %c0_i32_0 = arith.constant 0 : i32
    %c0_i32_1 = arith.constant 0 : i32
    return %c0_i32, %c0_i32_0 : i32, i32
  }
  func.func @transform_14(%arg0: i32, %arg1: i32) -> (i32, i32) {
    %c0_i32 = arith.constant 0 : i32
    %c0_i32_0 = arith.constant 0 : i32
    %c0_i32_1 = arith.constant 0 : i32
    return %c0_i32, %c0_i32_0 : i32, i32
  }
  func.func @transform_15(%arg0: i32, %arg1: i32) -> (i32, i32) {
    %c0_i32 = arith.constant 0 : i32
    %c0_i32_0 = arith.constant 0 : i32
    %c0_i32_1 = arith.constant 0 : i32
    return %c0_i32, %c0_i32_0 : i32, i32
  }
  func.func @transform_16(%arg0: i32, %arg1: i32) -> (i32, i32) {
    %c0_i32 = arith.constant 0 : i32
    %c0_i32_0 = arith.constant 0 : i32
    %c0_i32_1 = arith.constant 0 : i32
    return %c0_i32, %c0_i32_0 : i32, i32
  }
  func.func @transform_17(%arg0: i32, %arg1: i32) -> (i32, i32, i32) {
    %c0_i32 = arith.constant 0 : i32
    %c0_i32_0 = arith.constant 0 : i32
    return %arg0, %arg1, %c0_i32 : i32, i32, i32
  }
}

</mosaic_0001>

<llo_original>
// kernel: _lambda_.2
$region0: #{_lambda_.2}
  #allocation0 [shape = 'u32[]', space=smem, size = 0x4, offset = 0x4, fixed_abs, tag = 'smem constant byte address 0x4 - core index']
  #allocation1 [shape = 'u32[144,128]{1,0:T(1,128)}', space=vmem, size = 0x12000, scoped, tag = 'internal scratch']
  #allocation2 [shape = 'bf16[4,8,8]{2,1,0:T(8,128)(2,1)}', space=vmem, size = 0x2000, scoped, tag = 'scratch operand']
  #allocation3 [shape = 'bf16[4,8,8]{2,1,0:T(8,128)(2,1)}', space=vmem, size = 0x2000, scoped, tag = 'scratch operand']
  #allocation4 [shape = 'bf16[4,8,8]{2,1,0:T(8,128)(2,1)}', space=vmem, size = 0x2000, scoped, tag = 'scratch operand']
  %s0 = inlined_call_operand.vmem [shape: f32[2,8,32], index: 0, kind: input, shape index: {}, may-alias: {0,17}]
  %s1 = inlined_call_operand.vmem [shape: f32[1,32], index: 1, kind: input, shape index: {}]
  %s2 = inlined_call_operand.vmem [shape: f32[1,32], index: 2, kind: input, shape index: {}]
  %s3 = inlined_call_operand.vmem [shape: bf16[32,32], index: 3, kind: input, shape index: {}]
  %s4 = inlined_call_operand.vmem [shape: f32[1,32], index: 4, kind: input, shape index: {}]
  %s5 = inlined_call_operand.vmem [shape: bf16[32,32], index: 5, kind: input, shape index: {}]
  %s6 = inlined_call_operand.vmem [shape: f32[1,32], index: 6, kind: input, shape index: {}]
  %s7 = inlined_call_operand.vmem [shape: bf16[32,32], index: 7, kind: input, shape index: {}]
  %s8 = inlined_call_operand.vmem [shape: f32[1,32], index: 8, kind: input, shape index: {}]
  %s9 = inlined_call_operand.vmem [shape: bf16[32,32], index: 9, kind: input, shape index: {}]
  %s10 = inlined_call_operand.vmem [shape: f32[1,32], index: 10, kind: input, shape index: {}]
  %s11 = inlined_call_operand.vmem [shape: f32[1,32], index: 11, kind: input, shape index: {}]
  %s12 = inlined_call_operand.vmem [shape: f32[1,32], index: 12, kind: input, shape index: {}]
  %s13 = inlined_call_operand.vmem [shape: bf16[32,128], index: 13, kind: input, shape index: {}]
  %s14 = inlined_call_operand.vmem [shape: f32[1,128], index: 14, kind: input, shape index: {}]
  %s15 = inlined_call_operand.vmem [shape: bf16[128,32], index: 15, kind: input, shape index: {}]
  %s16 = inlined_call_operand.vmem [shape: f32[1,32], index: 16, kind: input, shape index: {}]
  %s17 = inlined_call_operand.vmem [shape: f32[2,8,32], index: 17, kind: output, shape index: {}, may-alias: {0,17}]
  %s18 = sld [smem:[#allocation0]]
  $region101: #{_lambda_.2} parent=0
    _
  %s20 = ssub.s32 1, %s18
  %s21 = scalar_select 0, %s20, %s18
  loop: start=0, step=1, limit=4
  $region2: #{_lambda_.2} parent=0 // loop_pre_header
    _
  $region3: #{_lambda_.2} parent=0 // loop_header
    %s23 = sphi 0, %s27
    %p24 = scmp.ge.s32.totalorder %s23, 4
    %s30 = sphi 0, %s42
    %s31 = sphi 0, %s38
    %s32 = sphi 0, %s30
    %s33 = sphi 0, %s31
    %s34 = sphi 0, %s32
    %s35 = sphi 0, %s33
    %s45 = sphi 0, %s47
    %s48 = sphi 0, %s45
    %s49 = sphi 0, %s48
    %s65 = sphi 0, %s49
    %s69 = sphi 0, %s69
    %s71 = sphi 0, %s69
    %s72 = sphi 0, %s71
    %s86 = sphi 0, %s72
    %s90 = sphi 0, %s90
    %s92 = sphi 0, %s90
    %s93 = sphi 0, %s92
    %s107 = sphi 0, %s93
    %s111 = sphi 0, %s111
    %s113 = sphi 0, %s111
    %s114 = sphi 0, %s113
    %s128 = sphi 0, %s114
    %s132 = sphi 0, %s132
    %s134 = sphi 0, %s132
    %s135 = sphi 0, %s134
    %s149 = sphi 0, %s135
    %s153 = sphi 0, %s153
    %s155 = sphi 0, %s153
    %s156 = sphi 0, %s155
    %s170 = sphi 0, %s156
    %s174 = sphi 0, %s174
    %s176 = sphi 0, %s174
    %s177 = sphi 0, %s176
    %s191 = sphi 0, %s177
    %s195 = sphi 0, %s195
    %s197 = sphi 0, %s195
    %s198 = sphi 0, %s197
    %s212 = sphi 0, %s198
    %s216 = sphi 0, %s216
    %s218 = sphi 0, %s216
    %s219 = sphi 0, %s218
    %s233 = sphi 0, %s219
    %s237 = sphi 0, %s237
    %s239 = sphi 0, %s237
    %s240 = sphi 0, %s239
    %s254 = sphi 0, %s240
    %s258 = sphi 0, %s258
    %s260 = sphi 0, %s258
    %s261 = sphi 0, %s260
    %s275 = sphi 0, %s261
    %s279 = sphi 0, %s279
    %s281 = sphi 0, %s279
    %s282 = sphi 0, %s281
    %s296 = sphi 0, %s282
    %s300 = sphi 0, %s300
    %s302 = sphi 0, %s300
    %s303 = sphi 0, %s302
    %s317 = sphi 0, %s303
    %s321 = sphi 0, %s321
    %s323 = sphi 0, %s321
    %s324 = sphi 0, %s323
    %s338 = sphi 0, %s324
    %s342 = sphi 0, %s342
    %s344 = sphi 0, %s342
    %s345 = sphi 0, %s344
    %s359 = sphi 0, %s345
    %s363 = sphi 0, %s363
    %s365 = sphi 0, %s363
    %s366 = sphi 0, %s365
    %s380 = sphi 0, %s366
    %s384 = sphi 0, %s384
    %s386 = sphi 0, %s384
    %s387 = sphi 0, %s386
    %s401 = sphi 0, %s387
    %s409 = sphi 0, %s411
    %s412 = sphi 0, %s409
    %s413 = sphi 0, %s412
    %s429 = sphi 0, %s413
  $region4: #{_lambda_.2} parent=0 // loop_header_branch
    %26 = sbr.rel (%p24) target = $region8
  $region5: #{_lambda_.2} parent=0 // loop_body
    %s28 = ssub.s32 %s23, 1
    %s29 = ssub.s32 %s23, 2
    %s36 = sadd.s32 1, %s31
    %p37 = scmp.ge.s32.totalorder %s36, 1
    %s38 = scalar_select %p37, 0, %s36
    %s39 = sadd.s32 1, %s30
    %s40 = scalar_select %p37, %s39, %s30
    %p41 = scmp.ge.s32.totalorder %s40, 2
    %s42 = scalar_select %p41, 0, %s40
    %s43 = ssub.s32 %s30, %s42
    %p44 = scmp.eq.s32.totalorder %s43, 0
    %s46 = sadd.s32 %s45, 1
    %s47 = scalar_select %p44, %s45, %s46
    %p50 = pneg %p44
    %p51 = scmp.eq.s32.totalorder %s23, 1
    %p52 = por %p50, %p51
    %p53 = scmp.ne.s32.totalorder %s45, %s48
    %p54 = scmp.eq.s32.totalorder %s23, 0
    %p55 = por %p53, %p54
    %p56 = scmp.ne.s32.totalorder %s45, %s48
    %p57 = scmp.eq.s32.totalorder %s28, 1
    %p58 = por %p56, %p57
    %p59 = scmp.ne.s32.totalorder %s48, %s49
    %p60 = scmp.eq.s32.totalorder %s28, 0
    %p61 = por %p59, %p60
    %p62 = scmp.ne.s32.totalorder %s48, %s49
    %p63 = scmp.eq.s32.totalorder %s29, 1
    %p64 = por %p62, %p63
    %p66 = scmp.ne.s32.totalorder %s49, %s65
    %p67 = scmp.eq.s32.totalorder %s29, 0
    %p68 = por %p66, %p67
    %s70 = sadd.s32 %s69, 1
    %p73 = scmp.eq.s32.totalorder %s23, 1
    %p74 = scmp.ne.s32.totalorder %s69, %s71
    %p75 = scmp.eq.s32.totalorder %s23, 0
    %p76 = por %p74, %p75
    %p77 = scmp.ne.s32.totalorder %s69, %s71
    %p78 = scmp.eq.s32.totalorder %s28, 1
    %p79 = por %p77, %p78
    %p80 = scmp.ne.s32.totalorder %s71, %s72
    %p81 = scmp.eq.s32.totalorder %s28, 0
    %p82 = por %p80, %p81
    %p83 = scmp.ne.s32.totalorder %s71, %s72
    %p84 = scmp.eq.s32.totalorder %s29, 1
    %p85 = por %p83, %p84
    %p87 = scmp.ne.s32.totalorder %s72, %s86
    %p88 = scmp.eq.s32.totalorder %s29, 0
    %p89 = por %p87, %p88
    %s91 = sadd.s32 %s90, 1
    %p94 = scmp.eq.s32.totalorder %s23, 1
    %p95 = scmp.ne.s32.totalorder %s90, %s92
    %p96 = scmp.eq.s32.totalorder %s23, 0
    %p97 = por %p95, %p96
    %p98 = scmp.ne.s32.totalorder %s90, %s92
    %p99 = scmp.eq.s32.totalorder %s28, 1
    %p100 = por %p98, %p99
    %p101 = scmp.ne.s32.totalorder %s92, %s93
    %p102 = scmp.eq.s32.totalorder %s28, 0
    %p103 = por %p101, %p102
    %p104 = scmp.ne.s32.totalorder %s92, %s93
    %p105 = scmp.eq.s32.totalorder %s29, 1
    %p106 = por %p104, %p105
    %p108 = scmp.ne.s32.totalorder %s93, %s107
    %p109 = scmp.eq.s32.totalorder %s29, 0
    %p110 = por %p108, %p109
    %s112 = sadd.s32 %s111, 1
    %p115 = scmp.eq.s32.totalorder %s23, 1
    %p116 = scmp.ne.s32.totalorder %s111, %s113
    %p117 = scmp.eq.s32.totalorder %s23, 0
    %p118 = por %p116, %p117
    %p119 = scmp.ne.s32.totalorder %s111, %s113
    %p120 = scmp.eq.s32.totalorder %s28, 1
    %p121 = por %p119, %p120
    %p122 = scmp.ne.s32.totalorder %s113, %s114
    %p123 = scmp.eq.s32.totalorder %s28, 0
    %p124 = por %p122, %p123
    %p125 = scmp.ne.s32.totalorder %s113, %s114
    %p126 = scmp.eq.s32.totalorder %s29, 1
    %p127 = por %p125, %p126
    %p129 = scmp.ne.s32.totalorder %s114, %s128
    %p130 = scmp.eq.s32.totalorder %s29, 0
    %p131 = por %p129, %p130
    %s133 = sadd.s32 %s132, 1
    %p136 = scmp.eq.s32.totalorder %s23, 1
    %p137 = scmp.ne.s32.totalorder %s132, %s134
    %p138 = scmp.eq.s32.totalorder %s23, 0
    %p139 = por %p137, %p138
    %p140 = scmp.ne.s32.totalorder %s132, %s134
    %p141 = scmp.eq.s32.totalorder %s28, 1
    %p142 = por %p140, %p141
    %p143 = scmp.ne.s32.totalorder %s134, %s135
    %p144 = scmp.eq.s32.totalorder %s28, 0
    %p145 = por %p143, %p144
    %p146 = scmp.ne.s32.totalorder %s134, %s135
    %p147 = scmp.eq.s32.totalorder %s29, 1
    %p148 = por %p146, %p147
    %p150 = scmp.ne.s32.totalorder %s135, %s149
    %p151 = scmp.eq.s32.totalorder %s29, 0
    %p152 = por %p150, %p151
    %s154 = sadd.s32 %s153, 1
    %p157 = scmp.eq.s32.totalorder %s23, 1
    %p158 = scmp.ne.s32.totalorder %s153, %s155
    %p159 = scmp.eq.s32.totalorder %s23, 0
    %p160 = por %p158, %p159
    %p161 = scmp.ne.s32.totalorder %s153, %s155
    %p162 = scmp.eq.s32.totalorder %s28, 1
    %p163 = por %p161, %p162
    %p164 = scmp.ne.s32.totalorder %s155, %s156
    %p165 = scmp.eq.s32.totalorder %s28, 0
    %p166 = por %p164, %p165
    %p167 = scmp.ne.s32.totalorder %s155, %s156
    %p168 = scmp.eq.s32.totalorder %s29, 1
    %p169 = por %p167, %p168
    %p171 = scmp.ne.s32.totalorder %s156, %s170
    %p172 = scmp.eq.s32.totalorder %s29, 0
    %p173 = por %p171, %p172
    %s175 = sadd.s32 %s174, 1
    %p178 = scmp.eq.s32.totalorder %s23, 1
    %p179 = scmp.ne.s32.totalorder %s174, %s176
    %p180 = scmp.eq.s32.totalorder %s23, 0
    %p181 = por %p179, %p180
    %p182 = scmp.ne.s32.totalorder %s174, %s176
    %p183 = scmp.eq.s32.totalorder %s28, 1
    %p184 = por %p182, %p183
    %p185 = scmp.ne.s32.totalorder %s176, %s177
    %p186 = scmp.eq.s32.totalorder %s28, 0
    %p187 = por %p185, %p186
    %p188 = scmp.ne.s32.totalorder %s176, %s177
    %p189 = scmp.eq.s32.totalorder %s29, 1
    %p190 = por %p188, %p189
    %p192 = scmp.ne.s32.totalorder %s177, %s191
    %p193 = scmp.eq.s32.totalorder %s29, 0
    %p194 = por %p192, %p193
    %s196 = sadd.s32 %s195, 1
    %p199 = scmp.eq.s32.totalorder %s23, 1
    %p200 = scmp.ne.s32.totalorder %s195, %s197
    %p201 = scmp.eq.s32.totalorder %s23, 0
    %p202 = por %p200, %p201
    %p203 = scmp.ne.s32.totalorder %s195, %s197
    %p204 = scmp.eq.s32.totalorder %s28, 1
    %p205 = por %p203, %p204
    %p206 = scmp.ne.s32.totalorder %s197, %s198
    %p207 = scmp.eq.s32.totalorder %s28, 0
    %p208 = por %p206, %p207
    %p209 = scmp.ne.s32.totalorder %s197, %s198
    %p210 = scmp.eq.s32.totalorder %s29, 1
    %p211 = por %p209, %p210
    %p213 = scmp.ne.s32.totalorder %s198, %s212
    %p214 = scmp.eq.s32.totalorder %s29, 0
    %p215 = por %p213, %p214
    %s217 = sadd.s32 %s216, 1
    %p220 = scmp.eq.s32.totalorder %s23, 1
    %p221 = scmp.ne.s32.totalorder %s216, %s218
    %p222 = scmp.eq.s32.totalorder %s23, 0
    %p223 = por %p221, %p222
    %p224 = scmp.ne.s32.totalorder %s216, %s218
    %p225 = scmp.eq.s32.totalorder %s28, 1
    %p226 = por %p224, %p225
    %p227 = scmp.ne.s32.totalorder %s218, %s219
    %p228 = scmp.eq.s32.totalorder %s28, 0
    %p229 = por %p227, %p228
    %p230 = scmp.ne.s32.totalorder %s218, %s219
    %p231 = scmp.eq.s32.totalorder %s29, 1
    %p232 = por %p230, %p231
    %p234 = scmp.ne.s32.totalorder %s219, %s233
    %p235 = scmp.eq.s32.totalorder %s29, 0
    %p236 = por %p234, %p235
    %s238 = sadd.s32 %s237, 1
    %p241 = scmp.eq.s32.totalorder %s23, 1
    %p242 = scmp.ne.s32.totalorder %s237, %s239
    %p243 = scmp.eq.s32.totalorder %s23, 0
    %p244 = por %p242, %p243
    %p245 = scmp.ne.s32.totalorder %s237, %s239
    %p246 = scmp.eq.s32.totalorder %s28, 1
    %p247 = por %p245, %p246
    %p248 = scmp.ne.s32.totalorder %s239, %s240
    %p249 = scmp.eq.s32.totalorder %s28, 0
    %p250 = por %p248, %p249
    %p251 = scmp.ne.s32.totalorder %s239, %s240
    %p252 = scmp.eq.s32.totalorder %s29, 1
    %p253 = por %p251, %p252
    %p255 = scmp.ne.s32.totalorder %s240, %s254
    %p256 = scmp.eq.s32.totalorder %s29, 0
    %p257 = por %p255, %p256
    %s259 = sadd.s32 %s258, 1
    %p262 = scmp.eq.s32.totalorder %s23, 1
    %p263 = scmp.ne.s32.totalorder %s258, %s260
    %p264 = scmp.eq.s32.totalorder %s23, 0
    %p265 = por %p263, %p264
    %p266 = scmp.ne.s32.totalorder %s258, %s260
    %p267 = scmp.eq.s32.totalorder %s28, 1
    %p268 = por %p266, %p267
    %p269 = scmp.ne.s32.totalorder %s260, %s261
    %p270 = scmp.eq.s32.totalorder %s28, 0
    %p271 = por %p269, %p270
    %p272 = scmp.ne.s32.totalorder %s260, %s261
    %p273 = scmp.eq.s32.totalorder %s29, 1
    %p274 = por %p272, %p273
    %p276 = scmp.ne.s32.totalorder %s261, %s275
    %p277 = scmp.eq.s32.totalorder %s29, 0
    %p278 = por %p276, %p277
    %s280 = sadd.s32 %s279, 1
    %p283 = scmp.eq.s32.totalorder %s23, 1
    %p284 = scmp.ne.s32.totalorder %s279, %s281
    %p285 = scmp.eq.s32.totalorder %s23, 0
    %p286 = por %p284, %p285
    %p287 = scmp.ne.s32.totalorder %s279, %s281
    %p288 = scmp.eq.s32.totalorder %s28, 1
    %p289 = por %p287, %p288
    %p290 = scmp.ne.s32.totalorder %s281, %s282
    %p291 = scmp.eq.s32.totalorder %s28, 0
    %p292 = por %p290, %p291
    %p293 = scmp.ne.s32.totalorder %s281, %s282
    %p294 = scmp.eq.s32.totalorder %s29, 1
    %p295 = por %p293, %p294
    %p297 = scmp.ne.s32.totalorder %s282, %s296
    %p298 = scmp.eq.s32.totalorder %s29, 0
    %p299 = por %p297, %p298
    %s301 = sadd.s32 %s300, 1
    %p304 = scmp.eq.s32.totalorder %s23, 1
    %p305 = scmp.ne.s32.totalorder %s300, %s302
    %p306 = scmp.eq.s32.totalorder %s23, 0
    %p307 = por %p305, %p306
    %p308 = scmp.ne.s32.totalorder %s300, %s302
    %p309 = scmp.eq.s32.totalorder %s28, 1
    %p310 = por %p308, %p309
    %p311 = scmp.ne.s32.totalorder %s302, %s303
    %p312 = scmp.eq.s32.totalorder %s28, 0
    %p313 = por %p311, %p312
    %p314 = scmp.ne.s32.totalorder %s302, %s303
    %p315 = scmp.eq.s32.totalorder %s29, 1
    %p316 = por %p314, %p315
    %p318 = scmp.ne.s32.totalorder %s303, %s317
    %p319 = scmp.eq.s32.totalorder %s29, 0
    %p320 = por %p318, %p319
    %s322 = sadd.s32 %s321, 1
    %p325 = scmp.eq.s32.totalorder %s23, 1
    %p326 = scmp.ne.s32.totalorder %s321, %s323
    %p327 = scmp.eq.s32.totalorder %s23, 0
    %p328 = por %p326, %p327
    %p329 = scmp.ne.s32.totalorder %s321, %s323
    %p330 = scmp.eq.s32.totalorder %s28, 1
    %p331 = por %p329, %p330
    %p332 = scmp.ne.s32.totalorder %s323, %s324
    %p333 = scmp.eq.s32.totalorder %s28, 0
    %p334 = por %p332, %p333
    %p335 = scmp.ne.s32.totalorder %s323, %s324
    %p336 = scmp.eq.s32.totalorder %s29, 1
    %p337 = por %p335, %p336
    %p339 = scmp.ne.s32.totalorder %s324, %s338
    %p340 = scmp.eq.s32.totalorder %s29, 0
    %p341 = por %p339, %p340
    %s343 = sadd.s32 %s342, 1
    %p346 = scmp.eq.s32.totalorder %s23, 1
    %p347 = scmp.ne.s32.totalorder %s342, %s344
    %p348 = scmp.eq.s32.totalorder %s23, 0
    %p349 = por %p347, %p348
    %p350 = scmp.ne.s32.totalorder %s342, %s344
    %p351 = scmp.eq.s32.totalorder %s28, 1
    %p352 = por %p350, %p351
    %p353 = scmp.ne.s32.totalorder %s344, %s345
    %p354 = scmp.eq.s32.totalorder %s28, 0
    %p355 = por %p353, %p354
    %p356 = scmp.ne.s32.totalorder %s344, %s345
    %p357 = scmp.eq.s32.totalorder %s29, 1
    %p358 = por %p356, %p357
    %p360 = scmp.ne.s32.totalorder %s345, %s359
    %p361 = scmp.eq.s32.totalorder %s29, 0
    %p362 = por %p360, %p361
    %s364 = sadd.s32 %s363, 1
    %p367 = scmp.eq.s32.totalorder %s23, 1
    %p368 = scmp.ne.s32.totalorder %s363, %s365
    %p369 = scmp.eq.s32.totalorder %s23, 0
    %p370 = por %p368, %p369
    %p371 = scmp.ne.s32.totalorder %s363, %s365
    %p372 = scmp.eq.s32.totalorder %s28, 1
    %p373 = por %p371, %p372
    %p374 = scmp.ne.s32.totalorder %s365, %s366
    %p375 = scmp.eq.s32.totalorder %s28, 0
    %p376 = por %p374, %p375
    %p377 = scmp.ne.s32.totalorder %s365, %s366
    %p378 = scmp.eq.s32.totalorder %s29, 1
    %p379 = por %p377, %p378
    %p381 = scmp.ne.s32.totalorder %s366, %s380
    %p382 = scmp.eq.s32.totalorder %s29, 0
    %p383 = por %p381, %p382
    %s385 = sadd.s32 %s384, 1
    %p388 = scmp.eq.s32.totalorder %s23, 1
    %p389 = scmp.ne.s32.totalorder %s384, %s386
    %p390 = scmp.eq.s32.totalorder %s23, 0
    %p391 = por %p389, %p390
    %p392 = scmp.ne.s32.totalorder %s384, %s386
    %p393 = scmp.eq.s32.totalorder %s28, 1
    %p394 = por %p392, %p393
    %p395 = scmp.ne.s32.totalorder %s386, %s387
    %p396 = scmp.eq.s32.totalorder %s28, 0
    %p397 = por %p395, %p396
    %p398 = scmp.ne.s32.totalorder %s386, %s387
    %p399 = scmp.eq.s32.totalorder %s29, 1
    %p400 = por %p398, %p399
    %p402 = scmp.ne.s32.totalorder %s387, %s401
    %p403 = scmp.eq.s32.totalorder %s29, 0
    %p404 = por %p402, %p403
    %s405 = ssub.s32 %s30, %s42
    %s406 = ssub.s32 %s31, %s38
    %s407 = sor.u32 %s405, %s406
    %p408 = scmp.eq.s32.totalorder %s407, 0
    %s410 = sadd.s32 %s409, 1
    %s411 = scalar_select %p408, %s409, %s410
    %p414 = pneg %p408
    %p415 = scmp.eq.s32.totalorder %s23, 1
    %p416 = por %p414, %p415
    %p417 = scmp.ne.s32.totalorder %s409, %s412
    %p418 = scmp.eq.s32.totalorder %s23, 0
    %p419 = por %p417, %p418
    %p420 = scmp.ne.s32.totalorder %s409, %s412
    %p421 = scmp.eq.s32.totalorder %s28, 1
    %p422 = por %p420, %p421
    %p423 = scmp.ne.s32.totalorder %s412, %s413
    %p424 = scmp.eq.s32.totalorder %s28, 0
    %p425 = por %p423, %p424
    %p426 = scmp.ne.s32.totalorder %s412, %s413
    %p427 = scmp.eq.s32.totalorder %s29, 1
    %p428 = por %p426, %p427
    %p430 = scmp.ne.s32.totalorder %s413, %s429
    %p431 = scmp.eq.s32.totalorder %s29, 0
    %p432 = por %p430, %p431
    %p433 = scmp.le.s32.totalorder 1, %s23
    %p434 = scmp.lt.s32.totalorder %s23, 3
    %p435 = pnand %p433, %p434
    %p436 = pneg %p435
    // Predicated region
    $region9: #{_lambda_.2} parent=5 // pred_check
      _
    $region10: #{_lambda_.2} parent=5 // pred_check_branch
      %438 = sbr.rel (%p435) target = $region12
    $region11: #{_lambda_.2} parent=5 // pred_region
      %s439 = ssub.s32 %s23, 1
      // Predicated region
      $region13: #{_lambda_.2} parent=11 // pred_check
        %p440 = pneg %p82
      $region14: #{_lambda_.2} parent=11 // pred_check_branch
        %442 = sbr.rel (%p440) target = $region16
      $region15: #{_lambda_.2} parent=11 // pred_region
        _
      $region16: #{_lambda_.2} parent=11 // pred_fallthru
        _
      // Predicated region
      $region17: #{_lambda_.2} parent=11 // pred_check
        %p443 = pneg %p103
      $region18: #{_lambda_.2} parent=11 // pred_check_branch
        %445 = sbr.rel (%p443) target = $region20
      $region19: #{_lambda_.2} parent=11 // pred_region
        _
      $region20: #{_lambda_.2} parent=11 // pred_fallthru
        _
      // Predicated region
      $region21: #{_lambda_.2} parent=11 // pred_check
        %p446 = pneg %p124
      $region22: #{_lambda_.2} parent=11 // pred_check_branch
        %448 = sbr.rel (%p446) target = $region24
      $region23: #{_lambda_.2} parent=11 // pred_region
        _
      $region24: #{_lambda_.2} parent=11 // pred_fallthru
        _
      // Predicated region
      $region25: #{_lambda_.2} parent=11 // pred_check
        %p449 = pneg %p145
      $region26: #{_lambda_.2} parent=11 // pred_check_branch
        %451 = sbr.rel (%p449) target = $region28
      $region27: #{_lambda_.2} parent=11 // pred_region
        _
      $region28: #{_lambda_.2} parent=11 // pred_fallthru
        _
      // Predicated region
      $region29: #{_lambda_.2} parent=11 // pred_check
        %p452 = pneg %p166
      $region30: #{_lambda_.2} parent=11 // pred_check_branch
        %454 = sbr.rel (%p452) target = $region32
      $region31: #{_lambda_.2} parent=11 // pred_region
        _
      $region32: #{_lambda_.2} parent=11 // pred_fallthru
        _
      // Predicated region
      $region33: #{_lambda_.2} parent=11 // pred_check
        %p455 = pneg %p187
      $region34: #{_lambda_.2} parent=11 // pred_check_branch
        %457 = sbr.rel (%p455) target = $region36
      $region35: #{_lambda_.2} parent=11 // pred_region
        _
      $region36: #{_lambda_.2} parent=11 // pred_fallthru
        _
      // Predicated region
      $region37: #{_lambda_.2} parent=11 // pred_check
        %p458 = pneg %p208
      $region38: #{_lambda_.2} parent=11 // pred_check_branch
        %460 = sbr.rel (%p458) target = $region40
      $region39: #{_lambda_.2} parent=11 // pred_region
        _
      $region40: #{_lambda_.2} parent=11 // pred_fallthru
        _
      // Predicated region
      $region41: #{_lambda_.2} parent=11 // pred_check
        %p461 = pneg %p229
      $region42: #{_lambda_.2} parent=11 // pred_check_branch
        %463 = sbr.rel (%p461) target = $region44
      $region43: #{_lambda_.2} parent=11 // pred_region
        _
      $region44: #{_lambda_.2} parent=11 // pred_fallthru
        _
      // Predicated region
      $region45: #{_lambda_.2} parent=11 // pred_check
        %p464 = pneg %p250
      $region46: #{_lambda_.2} parent=11 // pred_check_branch
        %466 = sbr.rel (%p464) target = $region48
      $region47: #{_lambda_.2} parent=11 // pred_region
        _
      $region48: #{_lambda_.2} parent=11 // pred_fallthru
        _
      // Predicated region
      $region49: #{_lambda_.2} parent=11 // pred_check
        %p467 = pneg %p271
      $region50: #{_lambda_.2} parent=11 // pred_check_branch
        %469 = sbr.rel (%p467) target = $region52
      $region51: #{_lambda_.2} parent=11 // pred_region
        _
      $region52: #{_lambda_.2} parent=11 // pred_fallthru
        _
      // Predicated region
      $region53: #{_lambda_.2} parent=11 // pred_check
        %p470 = pneg %p292
      $region54: #{_lambda_.2} parent=11 // pred_check_branch
        %472 = sbr.rel (%p470) target = $region56
      $region55: #{_lambda_.2} parent=11 // pred_region
        _
      $region56: #{_lambda_.2} parent=11 // pred_fallthru
        _
      // Predicated region
      $region57: #{_lambda_.2} parent=11 // pred_check
        %p473 = pneg %p313
      $region58: #{_lambda_.2} parent=11 // pred_check_branch
        %475 = sbr.rel (%p473) target = $region60
      $region59: #{_lambda_.2} parent=11 // pred_region
        _
      $region60: #{_lambda_.2} parent=11 // pred_fallthru
        _
      // Predicated region
      $region61: #{_lambda_.2} parent=11 // pred_check
        %p476 = pneg %p334
      $region62: #{_lambda_.2} parent=11 // pred_check_branch
        %478 = sbr.rel (%p476) target = $region64
      $region63: #{_lambda_.2} parent=11 // pred_region
        _
      $region64: #{_lambda_.2} parent=11 // pred_fallthru
        _
      // Predicated region
      $region65: #{_lambda_.2} parent=11 // pred_check
        %p479 = pneg %p355
      $region66: #{_lambda_.2} parent=11 // pred_check_branch
        %481 = sbr.rel (%p479) target = $region68
      $region67: #{_lambda_.2} parent=11 // pred_region
        _
      $region68: #{_lambda_.2} parent=11 // pred_fallthru
        _
      // Predicated region
      $region69: #{_lambda_.2} parent=11 // pred_check
        %p482 = pneg %p376
      $region70: #{_lambda_.2} parent=11 // pred_check_branch
        %484 = sbr.rel (%p482) target = $region72
      $region71: #{_lambda_.2} parent=11 // pred_region
        _
      $region72: #{_lambda_.2} parent=11 // pred_fallthru
        _
      // Predicated region
      $region73: #{_lambda_.2} parent=11 // pred_check
        %p485 = pneg %p397
      $region74: #{_lambda_.2} parent=11 // pred_check_branch
        %487 = sbr.rel (%p485) target = $region76
      $region75: #{_lambda_.2} parent=11 // pred_region
        _
      $region76: #{_lambda_.2} parent=11 // pred_fallthru
        _
    $region12: #{_lambda_.2} parent=5 // pred_fallthru
      _
    %p488 = scmp.lt.s32.totalorder %s23, 2
    // Predicated region
    $region77: #{_lambda_.2} parent=5 // pred_check
      %p489 = pneg %p488
    $region78: #{_lambda_.2} parent=5 // pred_check_branch
      %491 = sbr.rel (%p489) target = $region80
    $region79: #{_lambda_.2} parent=5 // pred_region
      // Predicated region
      $region81: #{_lambda_.2} parent=79 // pred_check
        %p492 = pneg %p55
      $region82: #{_lambda_.2} parent=79 // pred_check_branch
        %494 = sbr.rel (%p492) target = $region84
      $region83: #{_lambda_.2} parent=79 // pred_region
        %p495 = scmp.lt.s32.totalorder %s30, 1
        %s496 = scalar_select %p495, %s30, 1
        %s497 = smul.addr %s496, 8
        %s498 = scalar_lea.vmem %s0, %s497
      $region84: #{_lambda_.2} parent=79 // pred_fallthru
        _
    $region80: #{_lambda_.2} parent=5 // pred_fallthru
      _
    %p499 = scmp.le.s32.totalorder 1, %s23
    %p500 = scmp.lt.s32.totalorder %s23, 3
    %p501 = pnand %p499, %p500
    %p502 = pneg %p501
    // Predicated region
    $region85: #{_lambda_.2} parent=5 // pred_check
      _
    $region86: #{_lambda_.2} parent=5 // pred_check_branch
      %504 = sbr.rel (%p501) target = $region88
    $region87: #{_lambda_.2} parent=5 // pred_region
      %s505 = ssub.s32 %s23, 1
      %p506 = scmp.lt.s32.totalorder %s32, 1
      %s507 = scalar_select %p506, %s32, 1
      %s508 = smul.addr %s507, 8
      %s509 = scalar_lea.vmem %s0, %s508
      %p510 = pneg %p61
      %p511 = pneg %p58
      %p512 = pneg %p82
      %p513 = pneg %p79
      %p514 = pneg %p103
      %p515 = pneg %p100
      %p516 = pneg %p124
      %p517 = pneg %p121
      %p518 = pneg %p145
      %p519 = pneg %p142
      %p520 = pneg %p166
      %p521 = pneg %p163
      %p522 = pneg %p187
      %p523 = pneg %p184
      %p524 = pneg %p208
      %p525 = pneg %p205
      %p526 = pneg %p229
      %p527 = pneg %p226
      %p528 = pneg %p250
      %p529 = pneg %p247
      %p530 = pneg %p271
      %p531 = pneg %p268
      %p532 = pneg %p292
      %p533 = pneg %p289
      %p534 = pneg %p313
      %p535 = pneg %p310
      %p536 = pneg %p334
      %p537 = pneg %p331
      %p538 = pneg %p355
      %p539 = pneg %p352
      %p540 = pneg %p376
      %p541 = pneg %p373
      %p542 = pneg %p397
      %p543 = pneg %p394
      %p544 = pneg %p425
      %p545 = pneg %p422
      %p546 = scmp.lt.s32.totalorder %s32, 1
      %s547 = scalar_select %p546, %s32, 1
      %p548 = scmp.lt.s32.totalorder %s33, 0
      %s549 = scalar_select %p548, %s33, 0
      %s550 = sadd.s32 %s549, %s547
      %s551 = smul.addr %s550, 8
      %s552 = scalar_lea.vmem %s17, %s551
      %p553 = scmp.lt.s32.totalorder %s32, 1
      %s554 = scalar_select %p553, %s32, 1
      %s555 = smul.addr %s554, 8
      %s556 = scalar_lea.vmem %s0, %s555
      %p557 = scmp.lt.s32.totalorder %s32, 1
      %s558 = scalar_select %p557, %s32, 1
      %p559 = scmp.lt.s32.totalorder %s33, 0
      %s560 = scalar_select %p559, %s33, 0
      %s561 = sadd.s32 %s560, %s558
      %s562 = smul.addr %s561, 8
      %s563 = scalar_lea.vmem %s17, %s562
      %v565 = vld [vmem:[%s556] sm:$0xff]
      %vm566 = vcmask 261120
      %v567 = vsel %vm566, %v565, 0.0
      %568 = vadd.xlane.f32.xlu0 %v567
      %v569 = vpop.xlane.xlu0 %568
      %v570 = vrcp.pop 32.0
      %v571 = vmul.f32 %v569, %v570
      %v572 = vsub.f32 %v565, %v571
      %v573 = vmul.f32 %v572, %v572
      %v574 = vsel %vm566, %v573, 0.0
      %575 = vadd.xlane.f32.xlu0 %v574
      %v576 = vpop.xlane.xlu0 %575
      %v577 = vmul.f32 %v576, %v570
      %v578 = vadd.f32 %v577, 1e-05
      %v579 = vrsqrt.pop %v578
      %v580 = vmul.f32 %v572, %v579
      %v581 = vld [vmem:[%s1] sm:$0x1]
      %v583 = vlaneseq
      %v584 = vshrl.u32 %v583, 7
      %v585 = vsub.s32 0, %v584
      %v586 = vrot.slane %v581, %v585
      %v588 = vmul.f32 %v580, %v586
      %v589 = vld [vmem:[%s2] sm:$0x1]
      %v591 = vlaneseq
      %v592 = vshrl.u32 %v591, 7
      %v593 = vsub.s32 0, %v592
      %v594 = vrot.slane %v589, %v593
      %v596 = vadd.f32 %v588, %v594
      %v597 = vpack.c.bf16 %v596, %v596
      %v598 = vld [vmem:[%s5] sm:$0xf]
      %v599 = vld [vmem:[%s5 + $0x4] sm:$0xf]
      %v600 = vld [vmem:[%s5 + $0x8] sm:$0xf]
      %v601 = vld [vmem:[%s5 + $0xc] sm:$0xf]
      %v602 = vld [vmem:[%s6] sm:$0x1]
      %v604 = vlaneseq
      %v605 = vshrl.u32 %v604, 7
      %v606 = vsub.s32 0, %v605
      %v607 = vrot.slane %v602, %v606
      %v613 = vunpack.c.l.b16 %v598
      %v614 = vunpack.c.l.b16 %v599
      %v615 = vunpack.c.l.b16 %v600
      %v616 = vunpack.c.l.b16 %v601
      %v617 = vpack.c.b16 %v614, %v613
      %v618 = vpack.c.b16 %v616, %v615
      %v622 = vsel %vm566, %v597, 0
      %624 = vmatprep.subr.bf16.mxu0 0
      %625 = vmatpush1.bf16.msra.mxu0 0
      %626 = vmatprep.subr.bf16.mxu0 0
      %627 = vmatpush1.bf16.msra.mxu0 0
      %628 = vmatprep.subr.bf16.mxu0 0
      %629 = vmatpush1.bf16.msra.mxu0 0
      %630 = vmatprep.subr.bf16.mxu0 0
      %631 = vmatpush1.bf16.msra.mxu0 0
      %632 = vmatprep.subr.bf16.mxu0 0
      %633 = vmatpush1.bf16.msra.mxu0 0
      %634 = vmatprep.subr.bf16.mxu0 0
      %635 = vmatpush1.bf16.msra.mxu0 0
      %636 = vmatprep.subr.bf16.mxu0 0
      %637 = vmatpush1.bf16.msra.mxu0 %v618
      %638 = vmatprep.subr.bf16.mxu0 0
      %639 = vmatpush1.bf16.msra.mxu0 %v617
      %640 = vmatprep.subr.bf16.mxu0 0
      %641 = vmatpush2.bf16.msra.mxu0 0
      %642 = vmatprep.subr.bf16.mxu0 0
      %643 = vmatpush2.bf16.msra.mxu0 0
      %644 = vmatprep.subr.bf16.mxu0 0
      %645 = vmatpush2.bf16.msra.mxu0 0
      %646 = vmatprep.subr.bf16.mxu0 0
      %647 = vmatpush2.bf16.msra.mxu0 0
      %648 = vmatprep.subr.bf16.mxu0 0
      %649 = vmatpush2.bf16.msra.mxu0 0
      %650 = vmatprep.subr.bf16.mxu0 0
      %651 = vmatpush2.bf16.msra.mxu0 0
      %652 = vmatprep.subr.bf16.mxu0 0
      %653 = vmatpush2.bf16.msra.mxu0 0
      %654 = vmatprep.subr.bf16.mxu0 0
      %655 = vmatpush2.bf16.msra.mxu0 0
      %656 = vmatprep.mubr.bf16.mxu0 0
      %657 = vmatmul.mubr.bf16.gmra.mxu0 %v622
      %v658 = vpop.f32.mrf.mxu0
      %v659 = vadd.f32 %v607, %v658
      %v660 = vpop.f32.mrf.mxu0
      %v661 = vpop.f32.mrf.mxu0
      %v662 = vpop.f32.mrf.mxu0
      %663 = vdwg.mxu0
      %v664 = vld [vmem:[%s7] sm:$0xf]
      %v665 = vld [vmem:[%s7 + $0x4] sm:$0xf]
      %v666 = vld [vmem:[%s7 + $0x8] sm:$0xf]
      %v667 = vld [vmem:[%s7 + $0xc] sm:$0xf]
      %v668 = vld [vmem:[%s8] sm:$0x1]
      %v670 = vlaneseq
      %v671 = vshrl.u32 %v670, 7
      %v672 = vsub.s32 0, %v671
      %v673 = vrot.slane %v668, %v672
      %v679 = vunpack.c.l.b16 %v664
      %v680 = vunpack.c.l.b16 %v665
      %v681 = vunpack.c.l.b16 %v666
      %v682 = vunpack.c.l.b16 %v667
      %v683 = vpack.c.b16 %v680, %v679
      %v684 = vpack.c.b16 %v682, %v681
      %687 = vmatprep.subr.bf16.mxu0 0
      %688 = vmatpush1.bf16.msra.mxu0 0
      %689 = vmatprep.subr.bf16.mxu0 0
      %690 = vmatpush1.bf16.msra.mxu0 0
      %691 = vmatprep.subr.bf16.mxu0 0
      %692 = vmatpush1.bf16.msra.mxu0 0
      %693 = vmatprep.subr.bf16.mxu0 0
      %694 = vmatpush1.bf16.msra.mxu0 0
      %695 = vmatprep.subr.bf16.mxu0 0
      %696 = vmatpush1.bf16.msra.mxu0 0
      %697 = vmatprep.subr.bf16.mxu0 0
      %698 = vmatpush1.bf16.msra.mxu0 0
      %699 = vmatprep.subr.bf16.mxu0 0
      %700 = vmatpush1.bf16.msra.mxu0 %v684
      %701 = vmatprep.subr.bf16.mxu0 0
      %702 = vmatpush1.bf16.msra.mxu0 %v683
      %703 = vmatprep.subr.bf16.mxu0 0
      %704 = vmatpush2.bf16.msra.mxu0 0
      %705 = vmatprep.subr.bf16.mxu0 0
      %706 = vmatpush2.bf16.msra.mxu0 0
      %707 = vmatprep.subr.bf16.mxu0 0
      %708 = vmatpush2.bf16.msra.mxu0 0
      %709 = vmatprep.subr.bf16.mxu0 0
      %710 = vmatpush2.bf16.msra.mxu0 0
      %711 = vmatprep.subr.bf16.mxu0 0
      %712 = vmatpush2.bf16.msra.mxu0 0
      %713 = vmatprep.subr.bf16.mxu0 0
      %714 = vmatpush2.bf16.msra.mxu0 0
      %715 = vmatprep.subr.bf16.mxu0 0
      %716 = vmatpush2.bf16.msra.mxu0 0
      %717 = vmatprep.subr.bf16.mxu0 0
      %718 = vmatpush2.bf16.msra.mxu0 0
      %719 = vmatprep.mubr.bf16.mxu0 0
      %720 = vmatmul.mubr.bf16.gmra.mxu0 %v622
      %v721 = vpop.f32.mrf.mxu0
      %v722 = vadd.f32 %v673, %v721
      %v723 = vpop.f32.mrf.mxu0
      %v724 = vpop.f32.mrf.mxu0
      %v725 = vpop.f32.mrf.mxu0
      %726 = vdwg.mxu0
      %v727 = vpack.c.bf16 %v659, %v659
      %v728 = vpack.c.bf16 %v722, %v722
      %vm729 = vcmask 60416
      %730 = vst.msk [vmem:[#allocation3] sm:$0xf] %vm729, %v727
      %731 = vst.msk [vmem:[#allocation4] sm:$0xf] %vm729, %v728
      %v733 = vunpack.c.l.b16 %v727
      %v734 = vpack.c.b16 %v733, %v733
      %735 = vrot.lane.b32.xlu0 %v734, 120
      %v736 = vpop.permute.xlu0 %735
      %s738 = scalar_lea.vmem [#allocation3], 4
      %739 = vst.msk [vmem:[%s738] sm:$0xf] %vm729, %v736
      %v741 = vunpack.c.l.b16 %v728
      %v742 = vpack.c.b16 %v741, %v741
      %743 = vrot.lane.b32.xlu0 %v742, 120
      %v744 = vpop.permute.xlu0 %743
      %s746 = scalar_lea.vmem [#allocation4], 4
      %747 = vst.msk [vmem:[%s746] sm:$0xf] %vm729, %v744
      %748 = vrot.lane.b32.xlu0 %v734, 112
      %v749 = vpop.permute.xlu0 %748
      %s751 = scalar_lea.vmem [#allocation3], 8
      %752 = vst.msk [vmem:[%s751] sm:$0xf] %vm729, %v749
      %753 = vrot.lane.b32.xlu0 %v742, 112
      %v754 = vpop.permute.xlu0 %753
      %s756 = scalar_lea.vmem [#allocation4], 8
      %757 = vst.msk [vmem:[%s756] sm:$0xf] %vm729, %v754
      %758 = vrot.lane.b32.xlu0 %v734, 104
      %v759 = vpop.permute.xlu0 %758
      %s761 = scalar_lea.vmem [#allocation3], 12
      %762 = vst.msk [vmem:[%s761] sm:$0xf] %vm729, %v759
      %763 = vrot.lane.b32.xlu0 %v742, 104
      %v764 = vpop.permute.xlu0 %763
      %s766 = scalar_lea.vmem [#allocation4], 12
      %767 = vst.msk [vmem:[%s766] sm:$0xf] %vm729, %v764
      %v768 = vld [vmem:[%s3] sm:$0xf]
      %v769 = vld [vmem:[%s3 + $0x4] sm:$0xf]
      %v770 = vld [vmem:[%s3 + $0x8] sm:$0xf]
      %v771 = vld [vmem:[%s3 + $0xc] sm:$0xf]
      %v772 = vld [vmem:[%s4] sm:$0x1]
      %v774 = vlaneseq
      %v775 = vshrl.u32 %v774, 7
      %v776 = vsub.s32 0, %v775
      %v777 = vrot.slane %v772, %v776
      %v783 = vunpack.c.l.b16 %v768
      %v784 = vunpack.c.l.b16 %v769
      %v785 = vunpack.c.l.b16 %v770
      %v786 = vunpack.c.l.b16 %v771
      %v787 = vpack.c.b16 %v784, %v783
      %v788 = vpack.c.b16 %v786, %v785
      %791 = vmatprep.subr.bf16.mxu0 0
      %792 = vmatpush1.bf16.msra.mxu0 0
      %793 = vmatprep.subr.bf16.mxu0 0
      %794 = vmatpush1.bf16.msra.mxu0 0
      %795 = vmatprep.subr.bf16.mxu0 0
      %796 = vmatpush1.bf16.msra.mxu0 0
      %797 = vmatprep.subr.bf16.mxu0 0
      %798 = vmatpush1.bf16.msra.mxu0 0
      %799 = vmatprep.subr.bf16.mxu0 0
      %800 = vmatpush1.bf16.msra.mxu0 0
      %801 = vmatprep.subr.bf16.mxu0 0
      %802 = vmatpush1.bf16.msra.mxu0 0
      %803 = vmatprep.subr.bf16.mxu0 0
      %804 = vmatpush1.bf16.msra.mxu0 %v788
      %805 = vmatprep.subr.bf16.mxu0 0
      %806 = vmatpush1.bf16.msra.mxu0 %v787
      %807 = vmatprep.subr.bf16.mxu0 0
      %808 = vmatpush2.bf16.msra.mxu0 0
      %809 = vmatprep.subr.bf16.mxu0 0
      %810 = vmatpush2.bf16.msra.mxu0 0
      %811 = vmatprep.subr.bf16.mxu0 0
      %812 = vmatpush2.bf16.msra.mxu0 0
      %813 = vmatprep.subr.bf16.mxu0 0
      %814 = vmatpush2.bf16.msra.mxu0 0
      %815 = vmatprep.subr.bf16.mxu0 0
      %816 = vmatpush2.bf16.msra.mxu0 0
      %817 = vmatprep.subr.bf16.mxu0 0
      %818 = vmatpush2.bf16.msra.mxu0 0
      %819 = vmatprep.subr.bf16.mxu0 0
      %820 = vmatpush2.bf16.msra.mxu0 0
      %821 = vmatprep.subr.bf16.mxu0 0
      %822 = vmatpush2.bf16.msra.mxu0 0
      %823 = vmatprep.mubr.bf16.mxu0 0
      %824 = vmatmul.mubr.bf16.gmra.mxu0 %v622
      %v825 = vpop.f32.mrf.mxu0
      %v826 = vadd.f32 %v777, %v825
      %v827 = vpop.f32.mrf.mxu0
      %v828 = vpop.f32.mrf.mxu0
      %v829 = vpop.f32.mrf.mxu0
      %830 = vdwg.mxu0
      %v831 = vmul.f32 %v826, 0.35355338
      %v832 = vpack.c.bf16 %v831, %v831
      %833 = vst.msk [vmem:[#allocation2] sm:$0xf] %vm729, %v832
      %v835 = vunpack.c.l.b16 %v832
      %v836 = vpack.c.b16 %v835, %v835
      %837 = vrot.lane.b32.xlu0 %v836, 120
      %v838 = vpop.permute.xlu0 %837
      %s840 = scalar_lea.vmem [#allocation2], 4
      %841 = vst.msk [vmem:[%s840] sm:$0xf] %vm729, %v838
      %842 = vrot.lane.b32.xlu0 %v836, 112
      %v843 = vpop.permute.xlu0 %842
      %s845 = scalar_lea.vmem [#allocation2], 8
      %846 = vst.msk [vmem:[%s845] sm:$0xf] %vm729, %v843
      %847 = vrot.lane.b32.xlu0 %v836, 104
      %v848 = vpop.permute.xlu0 %847
      %s850 = scalar_lea.vmem [#allocation2], 12
      %851 = vst.msk [vmem:[%s850] sm:$0xf] %vm729, %v848
      %v852 = vld [vmem:[#allocation2] sm:$0xf]
      %v853 = vld [vmem:[#allocation2 + $0x4] sm:$0xf]
      %v854 = vld [vmem:[#allocation2 + $0x8] sm:$0xf]
      %v855 = vld [vmem:[#allocation2 + $0xc] sm:$0xf]
      %v856 = vld [vmem:[#allocation3] sm:$0xf]
      %v857 = vld [vmem:[#allocation3 + $0x4] sm:$0xf]
      %v858 = vld [vmem:[#allocation3 + $0x8] sm:$0xf]
      %v859 = vld [vmem:[#allocation3 + $0xc] sm:$0xf]
      %v860 = vld [vmem:[#allocation4] sm:$0xf]
      %v861 = vld [vmem:[#allocation4 + $0x4] sm:$0xf]
      %v862 = vld [vmem:[#allocation4 + $0x8] sm:$0xf]
      %v863 = vld [vmem:[#allocation4 + $0xc] sm:$0xf]
      %vm864 = vcmask 64512
      %v866 = vsel %vm864, %v852, 0
      %v869 = vsel %vm864, %v856, 0
      %871 = vmatprep.subr.bf16.mxu0 0
      %872 = vmatpush1.bf16.xpose.msra.mxu0 0
      %873 = vmatprep.subr.bf16.mxu0 0
      %874 = vmatpush1.bf16.xpose.msra.mxu0 0
      %875 = vmatprep.subr.bf16.mxu0 0
      %876 = vmatpush1.bf16.xpose.msra.mxu0 0
      %877 = vmatprep.subr.bf16.mxu0 0
      %878 = vmatpush1.bf16.xpose.msra.mxu0 0
      %879 = vmatprep.subr.bf16.mxu0 0
      %880 = vmatpush1.bf16.xpose.msra.mxu0 0
      %881 = vmatprep.subr.bf16.mxu0 0
      %882 = vmatpush1.bf16.xpose.msra.mxu0 0
      %883 = vmatprep.subr.bf16.mxu0 0
      %884 = vmatpush1.bf16.xpose.msra.mxu0 0
      %885 = vmatprep.subr.bf16.mxu0 0
      %886 = vmatpush1.bf16.xpose.msra.mxu0 %v869
      %887 = vmatprep.subr.bf16.mxu0 0
      %888 = vmatpush2.bf16.xpose.msra.mxu0 0
      %889 = vmatprep.subr.bf16.mxu0 0
      %890 = vmatpush2.bf16.xpose.msra.mxu0 0
      %891 = vmatprep.subr.bf16.mxu0 0
      %892 = vmatpush2.bf16.xpose.msra.mxu0 0
      %893 = vmatprep.subr.bf16.mxu0 0
      %894 = vmatpush2.bf16.xpose.msra.mxu0 0
      %895 = vmatprep.subr.bf16.mxu0 0
      %896 = vmatpush2.bf16.xpose.msra.mxu0 0
      %897 = vmatprep.subr.bf16.mxu0 0
      %898 = vmatpush2.bf16.xpose.msra.mxu0 0
      %899 = vmatprep.subr.bf16.mxu0 0
      %900 = vmatpush2.bf16.xpose.msra.mxu0 0
      %901 = vmatprep.subr.bf16.mxu0 0
      %902 = vmatpush2.bf16.xpose.msra.mxu0 0
      %903 = vmatprep.mubr.bf16.mxu0 0
      %904 = vmatmul.mubr.bf16.gmra.mxu0 %v866
      %v905 = vpop.f32.mrf.mxu0
      %v906 = vadd.f32 0.0, %v905
      %v907 = vpop.f32.mrf.mxu0
      %v908 = vpop.f32.mrf.mxu0
      %v909 = vpop.f32.mrf.mxu0
      %910 = vdwg.mxu0
      %v912 = vsel %vm864, %v853, 0
      %v915 = vsel %vm864, %v857, 0
      %917 = vmatprep.subr.bf16.mxu0 0
      %918 = vmatpush1.bf16.xpose.msra.mxu0 0
      %919 = vmatprep.subr.bf16.mxu0 0
      %920 = vmatpush1.bf16.xpose.msra.mxu0 0
      %921 = vmatprep.subr.bf16.mxu0 0
      %922 = vmatpush1.bf16.xpose.msra.mxu0 0
      %923 = vmatprep.subr.bf16.mxu0 0
      %924 = vmatpush1.bf16.xpose.msra.mxu0 0
      %925 = vmatprep.subr.bf16.mxu0 0
      %926 = vmatpush1.bf16.xpose.msra.mxu0 0
      %927 = vmatprep.subr.bf16.mxu0 0
      %928 = vmatpush1.bf16.xpose.msra.mxu0 0
      %929 = vmatprep.subr.bf16.mxu0 0
      %930 = vmatpush1.bf16.xpose.msra.mxu0 0
      %931 = vmatprep.subr.bf16.mxu0 0
      %932 = vmatpush1.bf16.xpose.msra.mxu0 %v915
      %933 = vmatprep.subr.bf16.mxu0 0
      %934 = vmatpush2.bf16.xpose.msra.mxu0 0
      %935 = vmatprep.subr.bf16.mxu0 0
      %936 = vmatpush2.bf16.xpose.msra.mxu0 0
      %937 = vmatprep.subr.bf16.mxu0 0
      %938 = vmatpush2.bf16.xpose.msra.mxu0 0
      %939 = vmatprep.subr.bf16.mxu0 0
      %940 = vmatpush2.bf16.xpose.msra.mxu0 0
      %941 = vmatprep.subr.bf16.mxu0 0
      %942 = vmatpush2.bf16.xpose.msra.mxu0 0
      %943 = vmatprep.subr.bf16.mxu0 0
      %944 = vmatpush2.bf16.xpose.msra.mxu0 0
      %945 = vmatprep.subr.bf16.mxu0 0
      %946 = vmatpush2.bf16.xpose.msra.mxu0 0
      %947 = vmatprep.subr.bf16.mxu0 0
      %948 = vmatpush2.bf16.xpose.msra.mxu0 0
      %949 = vmatprep.mubr.bf16.mxu0 0
      %950 = vmatmul.mubr.bf16.gmra.mxu0 %v912
      %v951 = vpop.f32.mrf.mxu0
      %v952 = vadd.f32 0.0, %v951
      %v953 = vpop.f32.mrf.mxu0
      %v954 = vpop.f32.mrf.mxu0
      %v955 = vpop.f32.mrf.mxu0
      %956 = vdwg.mxu0
      %v958 = vsel %vm864, %v854, 0
      %v961 = vsel %vm864, %v858, 0
      %963 = vmatprep.subr.bf16.mxu0 0
      %964 = vmatpush1.bf16.xpose.msra.mxu0 0
      %965 = vmatprep.subr.bf16.mxu0 0
      %966 = vmatpush1.bf16.xpose.msra.mxu0 0
      %967 = vmatprep.subr.bf16.mxu0 0
      %968 = vmatpush1.bf16.xpose.msra.mxu0 0
      %969 = vmatprep.subr.bf16.mxu0 0
      %970 = vmatpush1.bf16.xpose.msra.mxu0 0
      %971 = vmatprep.subr.bf16.mxu0 0
      %972 = vmatpush1.bf16.xpose.msra.mxu0 0
      %973 = vmatprep.subr.bf16.mxu0 0
      %974 = vmatpush1.bf16.xpose.msra.mxu0 0
      %975 = vmatprep.subr.bf16.mxu0 0
      %976 = vmatpush1.bf16.xpose.msra.mxu0 0
      %977 = vmatprep.subr.bf16.mxu0 0
      %978 = vmatpush1.bf16.xpose.msra.mxu0 %v961
      %979 = vmatprep.subr.bf16.mxu0 0
      %980 = vmatpush2.bf16.xpose.msra.mxu0 0
      %981 = vmatprep.subr.bf16.mxu0 0
      %982 = vmatpush2.bf16.xpose.msra.mxu0 0
      %983 = vmatprep.subr.bf16.mxu0 0
      %984 = vmatpush2.bf16.xpose.msra.mxu0 0
      %985 = vmatprep.subr.bf16.mxu0 0
      %986 = vmatpush2.bf16.xpose.msra.mxu0 0
      %987 = vmatprep.subr.bf16.mxu0 0
      %988 = vmatpush2.bf16.xpose.msra.mxu0 0
      %989 = vmatprep.subr.bf16.mxu0 0
      %990 = vmatpush2.bf16.xpose.msra.mxu0 0
      %991 = vmatprep.subr.bf16.mxu0 0
      %992 = vmatpush2.bf16.xpose.msra.mxu0 0
      %993 = vmatprep.subr.bf16.mxu0 0
      %994 = vmatpush2.bf16.xpose.msra.mxu0 0
      %995 = vmatprep.mubr.bf16.mxu0 0
      %996 = vmatmul.mubr.bf16.gmra.mxu0 %v958
      %v997 = vpop.f32.mrf.mxu0
      %v998 = vadd.f32 0.0, %v997
      %v999 = vpop.f32.mrf.mxu0
      %v1000 = vpop.f32.mrf.mxu0
      %v1001 = vpop.f32.mrf.mxu0
      %1002 = vdwg.mxu0
      %v1004 = vsel %vm864, %v855, 0
      %v1007 = vsel %vm864, %v859, 0
      %1009 = vmatprep.subr.bf16.mxu0 0
      %1010 = vmatpush1.bf16.xpose.msra.mxu0 0
      %1011 = vmatprep.subr.bf16.mxu0 0
      %1012 = vmatpush1.bf16.xpose.msra.mxu0 0
      %1013 = vmatprep.subr.bf16.mxu0 0
      %1014 = vmatpush1.bf16.xpose.msra.mxu0 0
      %1015 = vmatprep.subr.bf16.mxu0 0
      %1016 = vmatpush1.bf16.xpose.msra.mxu0 0
      %1017 = vmatprep.subr.bf16.mxu0 0
      %1018 = vmatpush1.bf16.xpose.msra.mxu0 0
      %1019 = vmatprep.subr.bf16.mxu0 0
      %1020 = vmatpush1.bf16.xpose.msra.mxu0 0
      %1021 = vmatprep.subr.bf16.mxu0 0
      %1022 = vmatpush1.bf16.xpose.msra.mxu0 0
      %1023 = vmatprep.subr.bf16.mxu0 0
      %1024 = vmatpush1.bf16.xpose.msra.mxu0 %v1007
      %1025 = vmatprep.subr.bf16.mxu0 0
      %1026 = vmatpush2.bf16.xpose.msra.mxu0 0
      %1027 = vmatprep.subr.bf16.mxu0 0
      %1028 = vmatpush2.bf16.xpose.msra.mxu0 0
      %1029 = vmatprep.subr.bf16.mxu0 0
      %1030 = vmatpush2.bf16.xpose.msra.mxu0 0
      %1031 = vmatprep.subr.bf16.mxu0 0
      %1032 = vmatpush2.bf16.xpose.msra.mxu0 0
      %1033 = vmatprep.subr.bf16.mxu0 0
      %1034 = vmatpush2.bf16.xpose.msra.mxu0 0
      %1035 = vmatprep.subr.bf16.mxu0 0
      %1036 = vmatpush2.bf16.xpose.msra.mxu0 0
      %1037 = vmatprep.subr.bf16.mxu0 0
      %1038 = vmatpush2.bf16.xpose.msra.mxu0 0
      %1039 = vmatprep.subr.bf16.mxu0 0
      %1040 = vmatpush2.bf16.xpose.msra.mxu0 0
      %1041 = vmatprep.mubr.bf16.mxu0 0
      %1042 = vmatmul.mubr.bf16.gmra.mxu0 %v1004
      %v1043 = vpop.f32.mrf.mxu0
      %v1044 = vadd.f32 0.0, %v1043
      %v1045 = vpop.f32.mrf.mxu0
      %v1046 = vpop.f32.mrf.mxu0
      %v1047 = vpop.f32.mrf.mxu0
      %1048 = vdwg.mxu0
      %v1049 = vsel %vm864, %v906, -inf
      %1050 = vmax.xlane.f32.xlu0 %v1049
      %v1051 = vpop.xlane.xlu0 %1050
      %v1052 = vsel %vm864, %v952, -inf
      %1053 = vmax.xlane.f32.xlu0 %v1052
      %v1054 = vpop.xlane.xlu0 %1053
      %v1055 = vsel %vm864, %v998, -inf
      %1056 = vmax.xlane.f32.xlu0 %v1055
      %v1057 = vpop.xlane.xlu0 %1056
      %v1058 = vsel %vm864, %v1044, -inf
      %1059 = vmax.xlane.f32.xlu0 %v1058
      %v1060 = vpop.xlane.xlu0 %1059
      %v1061 = vsub.f32 %v906, %v1051
      %v1062 = vsub.f32 %v952, %v1054
      %v1063 = vsub.f32 %v998, %v1057
      %v1064 = vsub.f32 %v1044, %v1060
      %v1065 = vmul.f32 %v1061, 1.442695
      %v1066 = vpow.pop %v1065
      %v1067 = vmul.f32 %v1062, 1.442695
      %v1068 = vpow.pop %v1067
      %v1069 = vmul.f32 %v1063, 1.442695
      %v1070 = vpow.pop %v1069
      %v1071 = vmul.f32 %v1064, 1.442695
      %v1072 = vpow.pop %v1071
      %v1073 = vsel %vm864, %v1066, 0.0
      %1074 = vadd.xlane.f32.xlu0 %v1073
      %v1075 = vpop.xlane.xlu0 %1074
      %v1076 = vsel %vm864, %v1068, 0.0
      %1077 = vadd.xlane.f32.xlu0 %v1076
      %v1078 = vpop.xlane.xlu0 %1077
      %v1079 = vsel %vm864, %v1070, 0.0
      %1080 = vadd.xlane.f32.xlu0 %v1079
      %v1081 = vpop.xlane.xlu0 %1080
      %v1082 = vsel %vm864, %v1072, 0.0
      %1083 = vadd.xlane.f32.xlu0 %v1082
      %v1084 = vpop.xlane.xlu0 %1083
      %v1085 = vrcp.pop %v1075
      %v1086 = vrcp.pop %v1078
      %v1087 = vrcp.pop %v1081
      %v1088 = vrcp.pop %v1084
      %v1089 = vmul.f32 %v1066, %v1085
      %v1090 = vmul.f32 %v1068, %v1086
      %v1091 = vmul.f32 %v1070, %v1087
      %v1092 = vmul.f32 %v1072, %v1088
      %v1093 = vpack.c.bf16 %v1089, %v1089
      %v1094 = vpack.c.bf16 %v1090, %v1090
      %v1095 = vpack.c.bf16 %v1091, %v1091
      %v1096 = vpack.c.bf16 %v1092, %v1092
      %v1098 = vsel %vm864, %v1093, 0
      %vm1100 = vcmask 1043456
      %v1102 = vsel %vm1100, %v860, 0
      %1104 = vmatprep.subr.bf16.mxu0 0
      %1105 = vmatpush1.bf16.msra.mxu0 0
      %1106 = vmatprep.subr.bf16.mxu0 0
      %1107 = vmatpush1.bf16.msra.mxu0 0
      %1108 = vmatprep.subr.bf16.mxu0 0
      %1109 = vmatpush1.bf16.msra.mxu0 0
      %1110 = vmatprep.subr.bf16.mxu0 0
      %1111 = vmatpush1.bf16.msra.mxu0 0
      %1112 = vmatprep.subr.bf16.mxu0 0
      %1113 = vmatpush1.bf16.msra.mxu0 0
      %1114 = vmatprep.subr.bf16.mxu0 0
      %1115 = vmatpush1.bf16.msra.mxu0 0
      %1116 = vmatprep.subr.bf16.mxu0 0
      %1117 = vmatpush1.bf16.msra.mxu0 0
      %1118 = vmatprep.subr.bf16.mxu0 0
      %1119 = vmatpush1.bf16.msra.mxu0 %v1102
      %1120 = vmatprep.subr.bf16.mxu0 0
      %1121 = vmatpush2.bf16.msra.mxu0 0
      %1122 = vmatprep.subr.bf16.mxu0 0
      %1123 = vmatpush2.bf16.msra.mxu0 0
      %1124 = vmatprep.subr.bf16.mxu0 0
      %1125 = vmatpush2.bf16.msra.mxu0 0
      %1126 = vmatprep.subr.bf16.mxu0 0
      %1127 = vmatpush2.bf16.msra.mxu0 0
      %1128 = vmatprep.subr.bf16.mxu0 0
      %1129 = vmatpush2.bf16.msra.mxu0 0
      %1130 = vmatprep.subr.bf16.mxu0 0
      %1131 = vmatpush2.bf16.msra.mxu0 0
      %1132 = vmatprep.subr.bf16.mxu0 0
      %1133 = vmatpush2.bf16.msra.mxu0 0
      %1134 = vmatprep.subr.bf16.mxu0 0
      %1135 = vmatpush2.bf16.msra.mxu0 0
      %1136 = vmatprep.mubr.bf16.mxu0 0
      %1137 = vmatmul.mubr.bf16.gmra.mxu0 %v1098
      %v1138 = vpop.f32.mrf.mxu0
      %v1139 = vadd.f32 0.0, %v1138
      %v1140 = vpop.f32.mrf.mxu0
      %v1141 = vpop.f32.mrf.mxu0
      %v1142 = vpop.f32.mrf.mxu0
      %1143 = vdwg.mxu0
      %v1145 = vsel %vm864, %v1094, 0
      %v1148 = vsel %vm1100, %v861, 0
      %1150 = vmatprep.subr.bf16.mxu0 0
      %1151 = vmatpush1.bf16.msra.mxu0 0
      %1152 = vmatprep.subr.bf16.mxu0 0
      %1153 = vmatpush1.bf16.msra.mxu0 0
      %1154 = vmatprep.subr.bf16.mxu0 0
      %1155 = vmatpush1.bf16.msra.mxu0 0
      %1156 = vmatprep.subr.bf16.mxu0 0
      %1157 = vmatpush1.bf16.msra.mxu0 0
      %1158 = vmatprep.subr.bf16.mxu0 0
      %1159 = vmatpush1.bf16.msra.mxu0 0
      %1160 = vmatprep.subr.bf16.mxu0 0
      %1161 = vmatpush1.bf16.msra.mxu0 0
      %1162 = vmatprep.subr.bf16.mxu0 0
      %1163 = vmatpush1.bf16.msra.mxu0 0
      %1164 = vmatprep.subr.bf16.mxu0 0
      %1165 = vmatpush1.bf16.msra.mxu0 %v1148
      %1166 = vmatprep.subr.bf16.mxu0 0
      %1167 = vmatpush2.bf16.msra.mxu0 0
      %1168 = vmatprep.subr.bf16.mxu0 0
      %1169 = vmatpush2.bf16.msra.mxu0 0
      %1170 = vmatprep.subr.bf16.mxu0 0
      %1171 = vmatpush2.bf16.msra.mxu0 0
      %1172 = vmatprep.subr.bf16.mxu0 0
      %1173 = vmatpush2.bf16.msra.mxu0 0
      %1174 = vmatprep.subr.bf16.mxu0 0
      %1175 = vmatpush2.bf16.msra.mxu0 0
      %1176 = vmatprep.subr.bf16.mxu0 0
      %1177 = vmatpush2.bf16.msra.mxu0 0
      %1178 = vmatprep.subr.bf16.mxu0 0
      %1179 = vmatpush2.bf16.msra.mxu0 0
      %1180 = vmatprep.subr.bf16.mxu0 0
      %1181 = vmatpush2.bf16.msra.mxu0 0
      %1182 = vmatprep.mubr.bf16.mxu0 0
      %1183 = vmatmul.mubr.bf16.gmra.mxu0 %v1145
      %v1184 = vpop.f32.mrf.mxu0
      %v1185 = vadd.f32 0.0, %v1184
      %v1186 = vpop.f32.mrf.mxu0
      %v1187 = vpop.f32.mrf.mxu0
      %v1188 = vpop.f32.mrf.mxu0
      %1189 = vdwg.mxu0
      %v1191 = vsel %vm864, %v1095, 0
      %v1194 = vsel %vm1100, %v862, 0
      %1196 = vmatprep.subr.bf16.mxu0 0
      %1197 = vmatpush1.bf16.msra.mxu0 0
      %1198 = vmatprep.subr.bf16.mxu0 0
      %1199 = vmatpush1.bf16.msra.mxu0 0
      %1200 = vmatprep.subr.bf16.mxu0 0
      %1201 = vmatpush1.bf16.msra.mxu0 0
      %1202 = vmatprep.subr.bf16.mxu0 0
      %1203 = vmatpush1.bf16.msra.mxu0 0
      %1204 = vmatprep.subr.bf16.mxu0 0
      %1205 = vmatpush1.bf16.msra.mxu0 0
      %1206 = vmatprep.subr.bf16.mxu0 0
      %1207 = vmatpush1.bf16.msra.mxu0 0
      %1208 = vmatprep.subr.bf16.mxu0 0
      %1209 = vmatpush1.bf16.msra.mxu0 0
      %1210 = vmatprep.subr.bf16.mxu0 0
      %1211 = vmatpush1.bf16.msra.mxu0 %v1194
      %1212 = vmatprep.subr.bf16.mxu0 0
      %1213 = vmatpush2.bf16.msra.mxu0 0
      %1214 = vmatprep.subr.bf16.mxu0 0
      %1215 = vmatpush2.bf16.msra.mxu0 0
      %1216 = vmatprep.subr.bf16.mxu0 0
      %1217 = vmatpush2.bf16.msra.mxu0 0
      %1218 = vmatprep.subr.bf16.mxu0 0
      %1219 = vmatpush2.bf16.msra.mxu0 0
      %1220 = vmatprep.subr.bf16.mxu0 0
      %1221 = vmatpush2.bf16.msra.mxu0 0
      %1222 = vmatprep.subr.bf16.mxu0 0
      %1223 = vmatpush2.bf16.msra.mxu0 0
      %1224 = vmatprep.subr.bf16.mxu0 0
      %1225 = vmatpush2.bf16.msra.mxu0 0
      %1226 = vmatprep.subr.bf16.mxu0 0
      %1227 = vmatpush2.bf16.msra.mxu0 0
      %1228 = vmatprep.mubr.bf16.mxu0 0
      %1229 = vmatmul.mubr.bf16.gmra.mxu0 %v1191
      %v1230 = vpop.f32.mrf.mxu0
      %v1231 = vadd.f32 0.0, %v1230
      %v1232 = vpop.f32.mrf.mxu0
      %v1233 = vpop.f32.mrf.mxu0
      %v1234 = vpop.f32.mrf.mxu0
      %1235 = vdwg.mxu0
      %v1237 = vsel %vm864, %v1096, 0
      %v1240 = vsel %vm1100, %v863, 0
      %1242 = vmatprep.subr.bf16.mxu0 0
      %1243 = vmatpush1.bf16.msra.mxu0 0
      %1244 = vmatprep.subr.bf16.mxu0 0
      %1245 = vmatpush1.bf16.msra.mxu0 0
      %1246 = vmatprep.subr.bf16.mxu0 0
      %1247 = vmatpush1.bf16.msra.mxu0 0
      %1248 = vmatprep.subr.bf16.mxu0 0
      %1249 = vmatpush1.bf16.msra.mxu0 0
      %1250 = vmatprep.subr.bf16.mxu0 0
      %1251 = vmatpush1.bf16.msra.mxu0 0
      %1252 = vmatprep.subr.bf16.mxu0 0
      %1253 = vmatpush1.bf16.msra.mxu0 0
      %1254 = vmatprep.subr.bf16.mxu0 0
      %1255 = vmatpush1.bf16.msra.mxu0 0
      %1256 = vmatprep.subr.bf16.mxu0 0
      %1257 = vmatpush1.bf16.msra.mxu0 %v1240
      %1258 = vmatprep.subr.bf16.mxu0 0
      %1259 = vmatpush2.bf16.msra.mxu0 0
      %1260 = vmatprep.subr.bf16.mxu0 0
      %1261 = vmatpush2.bf16.msra.mxu0 0
      %1262 = vmatprep.subr.bf16.mxu0 0
      %1263 = vmatpush2.bf16.msra.mxu0 0
      %1264 = vmatprep.subr.bf16.mxu0 0
      %1265 = vmatpush2.bf16.msra.mxu0 0
      %1266 = vmatprep.subr.bf16.mxu0 0
      %1267 = vmatpush2.bf16.msra.mxu0 0
      %1268 = vmatprep.subr.bf16.mxu0 0
      %1269 = vmatpush2.bf16.msra.mxu0 0
      %1270 = vmatprep.subr.bf16.mxu0 0
      %1271 = vmatpush2.bf16.msra.mxu0 0
      %1272 = vmatprep.subr.bf16.mxu0 0
      %1273 = vmatpush2.bf16.msra.mxu0 0
      %1274 = vmatprep.mubr.bf16.mxu0 0
      %1275 = vmatmul.mubr.bf16.gmra.mxu0 %v1237
      %v1276 = vpop.f32.mrf.mxu0
      %v1277 = vadd.f32 0.0, %v1276
      %v1278 = vpop.f32.mrf.mxu0
      %v1279 = vpop.f32.mrf.mxu0
      %v1280 = vpop.f32.mrf.mxu0
      %1281 = vdwg.mxu0
      %v1282 = vpack.c.bf16 %v1139, %v1139
      %v1283 = vpack.c.bf16 %v1185, %v1185
      %v1284 = vpack.c.bf16 %v1231, %v1231
      %v1285 = vpack.c.bf16 %v1277, %v1277
      %v1286 = vld [vmem:[%s10] sm:$0x1]
      %v1287 = vld [vmem:[%s9] sm:$0xf]
      %v1289 = vsel %vm864, %v1282, 0
      %v1292 = vsel %vm1100, %v1287, 0
      %1294 = vmatprep.subr.bf16.mxu0 0
      %1295 = vmatpush1.bf16.msra.mxu0 0
      %1296 = vmatprep.subr.bf16.mxu0 0
      %1297 = vmatpush1.bf16.msra.mxu0 0
      %1298 = vmatprep.subr.bf16.mxu0 0
      %1299 = vmatpush1.bf16.msra.mxu0 0
      %1300 = vmatprep.subr.bf16.mxu0 0
      %1301 = vmatpush1.bf16.msra.mxu0 0
      %1302 = vmatprep.subr.bf16.mxu0 0
      %1303 = vmatpush1.bf16.msra.mxu0 0
      %1304 = vmatprep.subr.bf16.mxu0 0
      %1305 = vmatpush1.bf16.msra.mxu0 0
      %1306 = vmatprep.subr.bf16.mxu0 0
      %1307 = vmatpush1.bf16.msra.mxu0 0
      %1308 = vmatprep.subr.bf16.mxu0 0
      %1309 = vmatpush1.bf16.msra.mxu0 %v1292
      %1310 = vmatprep.subr.bf16.mxu0 0
      %1311 = vmatpush2.bf16.msra.mxu0 0
      %1312 = vmatprep.subr.bf16.mxu0 0
      %1313 = vmatpush2.bf16.msra.mxu0 0
      %1314 = vmatprep.subr.bf16.mxu0 0
      %1315 = vmatpush2.bf16.msra.mxu0 0
      %1316 = vmatprep.subr.bf16.mxu0 0
      %1317 = vmatpush2.bf16.msra.mxu0 0
      %1318 = vmatprep.subr.bf16.mxu0 0
      %1319 = vmatpush2.bf16.msra.mxu0 0
      %1320 = vmatprep.subr.bf16.mxu0 0
      %1321 = vmatpush2.bf16.msra.mxu0 0
      %1322 = vmatprep.subr.bf16.mxu0 0
      %1323 = vmatpush2.bf16.msra.mxu0 0
      %1324 = vmatprep.subr.bf16.mxu0 0
      %1325 = vmatpush2.bf16.msra.mxu0 0
      %1326 = vmatprep.mubr.bf16.mxu0 0
      %1327 = vmatmul.mubr.bf16.gmra.mxu0 %v1289
      %v1328 = vpop.f32.mrf.mxu0
      %v1329 = vadd.f32 0.0, %v1328
      %v1330 = vpop.f32.mrf.mxu0
      %v1331 = vpop.f32.mrf.mxu0
      %v1332 = vpop.f32.mrf.mxu0
      %1333 = vdwg.mxu0
      %v1335 = vlaneseq
      %v1336 = vshrl.u32 %v1335, 7
      %v1337 = vsub.s32 0, %v1336
      %v1338 = vrot.slane %v1286, %v1337
      %v1340 = vadd.f32 %v1338, %v1329
      %v1341 = vld [vmem:[%s9 + $0x4] sm:$0xf]
      %v1343 = vsel %vm864, %v1283, 0
      %v1346 = vsel %vm1100, %v1341, 0
      %1348 = vmatprep.subr.bf16.mxu0 0
      %1349 = vmatpush1.bf16.msra.mxu0 0
      %1350 = vmatprep.subr.bf16.mxu0 0
      %1351 = vmatpush1.bf16.msra.mxu0 0
      %1352 = vmatprep.subr.bf16.mxu0 0
      %1353 = vmatpush1.bf16.msra.mxu0 0
      %1354 = vmatprep.subr.bf16.mxu0 0
      %1355 = vmatpush1.bf16.msra.mxu0 0
      %1356 = vmatprep.subr.bf16.mxu0 0
      %1357 = vmatpush1.bf16.msra.mxu0 0
      %1358 = vmatprep.subr.bf16.mxu0 0
      %1359 = vmatpush1.bf16.msra.mxu0 0
      %1360 = vmatprep.subr.bf16.mxu0 0
      %1361 = vmatpush1.bf16.msra.mxu0 0
      %1362 = vmatprep.subr.bf16.mxu0 0
      %1363 = vmatpush1.bf16.msra.mxu0 %v1346
      %1364 = vmatprep.subr.bf16.mxu0 0
      %1365 = vmatpush2.bf16.msra.mxu0 0
      %1366 = vmatprep.subr.bf16.mxu0 0
      %1367 = vmatpush2.bf16.msra.mxu0 0
      %1368 = vmatprep.subr.bf16.mxu0 0
      %1369 = vmatpush2.bf16.msra.mxu0 0
      %1370 = vmatprep.subr.bf16.mxu0 0
      %1371 = vmatpush2.bf16.msra.mxu0 0
      %1372 = vmatprep.subr.bf16.mxu0 0
      %1373 = vmatpush2.bf16.msra.mxu0 0
      %1374 = vmatprep.subr.bf16.mxu0 0
      %1375 = vmatpush2.bf16.msra.mxu0 0
      %1376 = vmatprep.subr.bf16.mxu0 0
      %1377 = vmatpush2.bf16.msra.mxu0 0
      %1378 = vmatprep.subr.bf16.mxu0 0
      %1379 = vmatpush2.bf16.msra.mxu0 0
      %1380 = vmatprep.mubr.bf16.mxu0 0
      %1381 = vmatmul.mubr.bf16.gmra.mxu0 %v1343
      %v1382 = vpop.f32.mrf.mxu0
      %v1383 = vadd.f32 0.0, %v1382
      %v1384 = vpop.f32.mrf.mxu0
      %v1385 = vpop.f32.mrf.mxu0
      %v1386 = vpop.f32.mrf.mxu0
      %1387 = vdwg.mxu0
      %v1388 = vadd.f32 %v1340, %v1383
      %v1389 = vld [vmem:[%s9 + $0x8] sm:$0xf]
      %v1391 = vsel %vm864, %v1284, 0
      %v1394 = vsel %vm1100, %v1389, 0
      %1396 = vmatprep.subr.bf16.mxu0 0
      %1397 = vmatpush1.bf16.msra.mxu0 0
      %1398 = vmatprep.subr.bf16.mxu0 0
      %1399 = vmatpush1.bf16.msra.mxu0 0
      %1400 = vmatprep.subr.bf16.mxu0 0
      %1401 = vmatpush1.bf16.msra.mxu0 0
      %1402 = vmatprep.subr.bf16.mxu0 0
      %1403 = vmatpush1.bf16.msra.mxu0 0
      %1404 = vmatprep.subr.bf16.mxu0 0
      %1405 = vmatpush1.bf16.msra.mxu0 0
      %1406 = vmatprep.subr.bf16.mxu0 0
      %1407 = vmatpush1.bf16.msra.mxu0 0
      %1408 = vmatprep.subr.bf16.mxu0 0
      %1409 = vmatpush1.bf16.msra.mxu0 0
      %1410 = vmatprep.subr.bf16.mxu0 0
      %1411 = vmatpush1.bf16.msra.mxu0 %v1394
      %1412 = vmatprep.subr.bf16.mxu0 0
      %1413 = vmatpush2.bf16.msra.mxu0 0
      %1414 = vmatprep.subr.bf16.mxu0 0
      %1415 = vmatpush2.bf16.msra.mxu0 0
      %1416 = vmatprep.subr.bf16.mxu0 0
      %1417 = vmatpush2.bf16.msra.mxu0 0
      %1418 = vmatprep.subr.bf16.mxu0 0
      %1419 = vmatpush2.bf16.msra.mxu0 0
      %1420 = vmatprep.subr.bf16.mxu0 0
      %1421 = vmatpush2.bf16.msra.mxu0 0
      %1422 = vmatprep.subr.bf16.mxu0 0
      %1423 = vmatpush2.bf16.msra.mxu0 0
      %1424 = vmatprep.subr.bf16.mxu0 0
      %1425 = vmatpush2.bf16.msra.mxu0 0
      %1426 = vmatprep.subr.bf16.mxu0 0
      %1427 = vmatpush2.bf16.msra.mxu0 0
      %1428 = vmatprep.mubr.bf16.mxu0 0
      %1429 = vmatmul.mubr.bf16.gmra.mxu0 %v1391
      %v1430 = vpop.f32.mrf.mxu0
      %v1431 = vadd.f32 0.0, %v1430
      %v1432 = vpop.f32.mrf.mxu0
      %v1433 = vpop.f32.mrf.mxu0
      %v1434 = vpop.f32.mrf.mxu0
      %1435 = vdwg.mxu0
      %v1436 = vadd.f32 %v1388, %v1431
      %v1437 = vld [vmem:[%s9 + $0xc] sm:$0xf]
      %v1439 = vsel %vm864, %v1285, 0
      %v1442 = vsel %vm1100, %v1437, 0
      %1444 = vmatprep.subr.bf16.mxu0 0
      %1445 = vmatpush1.bf16.msra.mxu0 0
      %1446 = vmatprep.subr.bf16.mxu0 0
      %1447 = vmatpush1.bf16.msra.mxu0 0
      %1448 = vmatprep.subr.bf16.mxu0 0
      %1449 = vmatpush1.bf16.msra.mxu0 0
      %1450 = vmatprep.subr.bf16.mxu0 0
      %1451 = vmatpush1.bf16.msra.mxu0 0
      %1452 = vmatprep.subr.bf16.mxu0 0
      %1453 = vmatpush1.bf16.msra.mxu0 0
      %1454 = vmatprep.subr.bf16.mxu0 0
      %1455 = vmatpush1.bf16.msra.mxu0 0
      %1456 = vmatprep.subr.bf16.mxu0 0
      %1457 = vmatpush1.bf16.msra.mxu0 0
      %1458 = vmatprep.subr.bf16.mxu0 0
      %1459 = vmatpush1.bf16.msra.mxu0 %v1442
      %1460 = vmatprep.subr.bf16.mxu0 0
      %1461 = vmatpush2.bf16.msra.mxu0 0
      %1462 = vmatprep.subr.bf16.mxu0 0
      %1463 = vmatpush2.bf16.msra.mxu0 0
      %1464 = vmatprep.subr.bf16.mxu0 0
      %1465 = vmatpush2.bf16.msra.mxu0 0
      %1466 = vmatprep.subr.bf16.mxu0 0
      %1467 = vmatpush2.bf16.msra.mxu0 0
      %1468 = vmatprep.subr.bf16.mxu0 0
      %1469 = vmatpush2.bf16.msra.mxu0 0
      %1470 = vmatprep.subr.bf16.mxu0 0
      %1471 = vmatpush2.bf16.msra.mxu0 0
      %1472 = vmatprep.subr.bf16.mxu0 0
      %1473 = vmatpush2.bf16.msra.mxu0 0
      %1474 = vmatprep.subr.bf16.mxu0 0
      %1475 = vmatpush2.bf16.msra.mxu0 0
      %1476 = vmatprep.mubr.bf16.mxu0 0
      %1477 = vmatmul.mubr.bf16.gmra.mxu0 %v1439
      %v1478 = vpop.f32.mrf.mxu0
      %v1479 = vadd.f32 0.0, %v1478
      %v1480 = vpop.f32.mrf.mxu0
      %v1481 = vpop.f32.mrf.mxu0
      %v1482 = vpop.f32.mrf.mxu0
      %1483 = vdwg.mxu0
      %v1484 = vadd.f32 %v1436, %v1479
      %v1485 = vadd.f32 %v565, %v1484
      %v1486 = vsel %vm566, %v1485, 0.0
      %1487 = vadd.xlane.f32.xlu0 %v1486
      %v1488 = vpop.xlane.xlu0 %1487
      %v1489 = vmul.f32 %v1488, %v570
      %v1490 = vsub.f32 %v1485, %v1489
      %v1491 = vmul.f32 %v1490, %v1490
      %v1492 = vsel %vm566, %v1491, 0.0
      %1493 = vadd.xlane.f32.xlu0 %v1492
      %v1494 = vpop.xlane.xlu0 %1493
      %v1495 = vmul.f32 %v1494, %v570
      %v1496 = vadd.f32 %v1495, 1e-05
      %v1497 = vrsqrt.pop %v1496
      %v1498 = vmul.f32 %v1490, %v1497
      %v1499 = vld [vmem:[%s11] sm:$0x1]
      %v1501 = vlaneseq
      %v1502 = vshrl.u32 %v1501, 7
      %v1503 = vsub.s32 0, %v1502
      %v1504 = vrot.slane %v1499, %v1503
      %v1506 = vmul.f32 %v1498, %v1504
      %v1507 = vld [vmem:[%s12] sm:$0x1]
      %v1509 = vlaneseq
      %v1510 = vshrl.u32 %v1509, 7
      %v1511 = vsub.s32 0, %v1510
      %v1512 = vrot.slane %v1507, %v1511
      %v1514 = vadd.f32 %v1506, %v1512
      %v1515 = vpack.c.bf16 %v1514, %v1514
      %v1516 = vld [vmem:[%s13] sm:$0xf]
      %v1517 = vld [vmem:[%s13 + $0x4] sm:$0xf]
      %v1518 = vld [vmem:[%s13 + $0x8] sm:$0xf]
      %v1519 = vld [vmem:[%s13 + $0xc] sm:$0xf]
      %v1520 = vld [vmem:[%s14] sm:$0x1]
      %v1522 = vlaneseq
      %v1523 = vshrl.u32 %v1522, 7
      %v1524 = vsub.s32 0, %v1523
      %v1525 = vrot.slane %v1520, %v1524
      %v1531 = vunpack.c.l.b16 %v1516
      %v1532 = vunpack.c.l.b16 %v1517
      %v1533 = vunpack.c.l.b16 %v1518
      %v1534 = vunpack.c.l.b16 %v1519
      %v1535 = vpack.c.b16 %v1532, %v1531
      %v1536 = vpack.c.b16 %v1534, %v1533
      %v1540 = vsel %vm566, %v1515, 0
      %1542 = vmatprep.subr.bf16.mxu0 0
      %1543 = vmatpush1.bf16.msra.mxu0 0
      %1544 = vmatprep.subr.bf16.mxu0 0
      %1545 = vmatpush1.bf16.msra.mxu0 0
      %1546 = vmatprep.subr.bf16.mxu0 0
      %1547 = vmatpush1.bf16.msra.mxu0 0
      %1548 = vmatprep.subr.bf16.mxu0 0
      %1549 = vmatpush1.bf16.msra.mxu0 0
      %1550 = vmatprep.subr.bf16.mxu0 0
      %1551 = vmatpush1.bf16.msra.mxu0 0
      %1552 = vmatprep.subr.bf16.mxu0 0
      %1553 = vmatpush1.bf16.msra.mxu0 0
      %1554 = vmatprep.subr.bf16.mxu0 0
      %1555 = vmatpush1.bf16.msra.mxu0 %v1536
      %1556 = vmatprep.subr.bf16.mxu0 0
      %1557 = vmatpush1.bf16.msra.mxu0 %v1535
      %1558 = vmatprep.subr.bf16.mxu0 0
      %1559 = vmatpush2.bf16.msra.mxu0 0
      %1560 = vmatprep.subr.bf16.mxu0 0
      %1561 = vmatpush2.bf16.msra.mxu0 0
      %1562 = vmatprep.subr.bf16.mxu0 0
      %1563 = vmatpush2.bf16.msra.mxu0 0
      %1564 = vmatprep.subr.bf16.mxu0 0
      %1565 = vmatpush2.bf16.msra.mxu0 0
      %1566 = vmatprep.subr.bf16.mxu0 0
      %1567 = vmatpush2.bf16.msra.mxu0 0
      %1568 = vmatprep.subr.bf16.mxu0 0
      %1569 = vmatpush2.bf16.msra.mxu0 0
      %1570 = vmatprep.subr.bf16.mxu0 0
      %1571 = vmatpush2.bf16.msra.mxu0 0
      %1572 = vmatprep.subr.bf16.mxu0 0
      %1573 = vmatpush2.bf16.msra.mxu0 0
      %1574 = vmatprep.mubr.bf16.mxu0 0
      %1575 = vmatmul.mubr.bf16.gmra.mxu0 %v1540
      %v1576 = vpop.f32.mrf.mxu0
      %v1577 = vadd.f32 %v1525, %v1576
      %v1578 = vpop.f32.mrf.mxu0
      %v1579 = vpop.f32.mrf.mxu0
      %v1580 = vpop.f32.mrf.mxu0
      %1581 = vdwg.mxu0
      %v1582 = vmul.f32 %v1577, 1.702
      %v1583 = vxor.u32 %v1582, 2147483648
      %v1584 = vmul.f32 %v1583, 1.442695
      %v1585 = vpow.pop %v1584
      %v1586 = vadd.f32 %v1585, 1.0
      %v1587 = vrcp.pop %v1586
      %v1588 = vmul.f32 1.0, %v1587
      %v1589 = vmul.f32 %v1577, %v1588
      %v1590 = vpack.c.bf16 %v1589, %v1589
      %v1591 = vld [vmem:[%s15] sm:$0xf]
      %v1592 = vld [vmem:[%s15 + $0x4] sm:$0xf]
      %v1593 = vld [vmem:[%s15 + $0x8] sm:$0xf]
      %v1594 = vld [vmem:[%s15 + $0xc] sm:$0xf]
      %v1595 = vld [vmem:[%s15 + $0x10] sm:$0xf]
      %v1596 = vld [vmem:[%s15 + $0x14] sm:$0xf]
      %v1597 = vld [vmem:[%s15 + $0x18] sm:$0xf]
      %v1598 = vld [vmem:[%s15 + $0x1c] sm:$0xf]
      %v1599 = vld [vmem:[%s15 + $0x20] sm:$0xf]
      %v1600 = vld [vmem:[%s15 + $0x24] sm:$0xf]
      %v1601 = vld [vmem:[%s15 + $0x28] sm:$0xf]
      %v1602 = vld [vmem:[%s15 + $0x2c] sm:$0xf]
      %v1603 = vld [vmem:[%s15 + $0x30] sm:$0xf]
      %v1604 = vld [vmem:[%s15 + $0x34] sm:$0xf]
      %v1605 = vld [vmem:[%s15 + $0x38] sm:$0xf]
      %v1606 = vld [vmem:[%s15 + $0x3c] sm:$0xf]
      %v1607 = vld [vmem:[%s16] sm:$0x1]
      %v1609 = vlaneseq
      %v1610 = vshrl.u32 %v1609, 7
      %v1611 = vsub.s32 0, %v1610
      %v1612 = vrot.slane %v1607, %v1611
      %v1630 = vunpack.c.l.b16 %v1591
      %v1631 = vunpack.c.l.b16 %v1592
      %v1632 = vunpack.c.l.b16 %v1593
      %v1633 = vunpack.c.l.b16 %v1594
      %v1634 = vunpack.c.l.b16 %v1595
      %v1635 = vunpack.c.l.b16 %v1596
      %v1636 = vunpack.c.l.b16 %v1597
      %v1637 = vunpack.c.l.b16 %v1598
      %v1638 = vunpack.c.l.b16 %v1599
      %v1639 = vunpack.c.l.b16 %v1600
      %v1640 = vunpack.c.l.b16 %v1601
      %v1641 = vunpack.c.l.b16 %v1602
      %v1642 = vunpack.c.l.b16 %v1603
      %v1643 = vunpack.c.l.b16 %v1604
      %v1644 = vunpack.c.l.b16 %v1605
      %v1645 = vunpack.c.l.b16 %v1606
      %v1646 = vpack.c.b16 %v1631, %v1630
      %v1647 = vpack.c.b16 %v1633, %v1632
      %v1648 = vpack.c.b16 %v1635, %v1634
      %v1649 = vpack.c.b16 %v1637, %v1636
      %v1650 = vpack.c.b16 %v1639, %v1638
      %v1651 = vpack.c.b16 %v1641, %v1640
      %v1652 = vpack.c.b16 %v1643, %v1642
      %v1653 = vpack.c.b16 %v1645, %v1644
      %1662 = vmatprep.subr.bf16.mxu0 0
      %1663 = vmatpush1.bf16.msra.mxu0 %v1653
      %1664 = vmatprep.subr.bf16.mxu0 0
      %1665 = vmatpush1.bf16.msra.mxu0 %v1652
      %1666 = vmatprep.subr.bf16.mxu0 0
      %1667 = vmatpush1.bf16.msra.mxu0 %v1651
      %1668 = vmatprep.subr.bf16.mxu0 0
      %1669 = vmatpush1.bf16.msra.mxu0 %v1650
      %1670 = vmatprep.subr.bf16.mxu0 0
      %1671 = vmatpush1.bf16.msra.mxu0 %v1649
      %1672 = vmatprep.subr.bf16.mxu0 0
      %1673 = vmatpush1.bf16.msra.mxu0 %v1648
      %1674 = vmatprep.subr.bf16.mxu0 0
      %1675 = vmatpush1.bf16.msra.mxu0 %v1647
      %1676 = vmatprep.subr.bf16.mxu0 0
      %1677 = vmatpush1.bf16.msra.mxu0 %v1646
      %1678 = vmatprep.subr.bf16.mxu0 0
      %1679 = vmatpush2.bf16.msra.mxu0 0
      %1680 = vmatprep.subr.bf16.mxu0 0
      %1681 = vmatpush2.bf16.msra.mxu0 0
      %1682 = vmatprep.subr.bf16.mxu0 0
      %1683 = vmatpush2.bf16.msra.mxu0 0
      %1684 = vmatprep.subr.bf16.mxu0 0
      %1685 = vmatpush2.bf16.msra.mxu0 0
      %1686 = vmatprep.subr.bf16.mxu0 0
      %1687 = vmatpush2.bf16.msra.mxu0 0
      %1688 = vmatprep.subr.bf16.mxu0 0
      %1689 = vmatpush2.bf16.msra.mxu0 0
      %1690 = vmatprep.subr.bf16.mxu0 0
      %1691 = vmatpush2.bf16.msra.mxu0 0
      %1692 = vmatprep.subr.bf16.mxu0 0
      %1693 = vmatpush2.bf16.msra.mxu0 0
      %1694 = vmatprep.mubr.bf16.mxu0 0
      %1695 = vmatmul.mubr.bf16.gmra.mxu0 %v1590
      %v1696 = vpop.f32.mrf.mxu0
      %v1697 = vadd.f32 %v1612, %v1696
      %v1698 = vpop.f32.mrf.mxu0
      %v1699 = vpop.f32.mrf.mxu0
      %v1700 = vpop.f32.mrf.mxu0
      %1701 = vdwg.mxu0
      %v1702 = vadd.f32 %v1485, %v1697
      %1703 = vst.msk [vmem:[%s563] sm:$0xff] %vm566, %v1702
      %p1704 = scmp.lt.s32.totalorder %s32, 1
      %s1705 = scalar_select %p1704, %s32, 1
      %p1706 = scmp.lt.s32.totalorder %s33, 0
      %s1707 = scalar_select %p1706, %s33, 0
      %s1708 = sadd.s32 %s1707, %s1705
      %s1709 = smul.addr %s1708, 8
      %s1710 = scalar_lea.vmem %s17, %s1709
      // Predicated region
      $region89: #{_lambda_.2} parent=87 // pred_check
        %p1711 = pneg %p422
      $region90: #{_lambda_.2} parent=87 // pred_check_branch
        %1713 = sbr.rel (%p1711) target = $region92
      $region91: #{_lambda_.2} parent=87 // pred_region
        _
      $region92: #{_lambda_.2} parent=87 // pred_fallthru
        _
    $region88: #{_lambda_.2} parent=5 // pred_fallthru
      _
    %p1714 = scmp.le.s32.totalorder 2, %s23
    // Predicated region
    $region93: #{_lambda_.2} parent=5 // pred_check
      %p1715 = pneg %p1714
    $region94: #{_lambda_.2} parent=5 // pred_check_branch
      %1717 = sbr.rel (%p1715) target = $region96
    $region95: #{_lambda_.2} parent=5 // pred_region
      %s1718 = ssub.s32 %s23, 2
      // Predicated region
      $region97: #{_lambda_.2} parent=95 // pred_check
        %p1719 = pneg %p428
      $region98: #{_lambda_.2} parent=95 // pred_check_branch
        %1721 = sbr.rel (%p1719) target = $region100
      $region99: #{_lambda_.2} parent=95 // pred_region
        %p1722 = scmp.lt.s32.totalorder %s34, 1
        %s1723 = scalar_select %p1722, %s34, 1
        %p1724 = scmp.lt.s32.totalorder %s35, 0
        %s1725 = scalar_select %p1724, %s35, 0
        %s1726 = sadd.s32 %s1725, %s1723
        %s1727 = smul.addr %s1726, 8
        %s1728 = scalar_lea.vmem %s17, %s1727
      $region100: #{_lambda_.2} parent=95 // pred_fallthru
        _
    $region96: #{_lambda_.2} parent=5 // pred_fallthru
      _
  $region6: #{_lambda_.2} parent=0 // loop_footer
    %s27 = sadd.s32 1, %s23
  $region7: #{_lambda_.2} parent=0 // loop_footer_branch
    %22 = sbr.rel target = $region3
  $region8: #{_lambda_.2} parent=0 // loop_exit
    _

</llo_original>
